<compile_context>
chip_gen: v7x
topology: tpu7x:2x2x1
jax: 0.10.0
libtpu: 0.0.40
codegen_flags: <defaults>
</compile_context>

<pallas_src>
import jax
import jax.numpy as jnp
from jax import lax
from jax.experimental import pallas as pl
from jax.experimental.pallas import tpu as pltpu


def _cross_prop_kernel(seg_ref, dep_ref, w_ref, b_ref, out_ref,
                       seg_pad_ref, dep_pad_ref, x_ref):
    # seg_ref/dep_ref : (1, H, W, C)   unpadded NHWC image (one batch element)
    # w_ref           : (18C, 2C)      fused per-tap weights
    # b_ref           : (1, 2C)        fused biases [b_s1+b_s2 | b_d1+b_d2]
    # out_ref         : (1, tile_m, 2C) fused output rows [seg | dep]
    # seg_pad_ref/dep_pad_ref : (H+2, W+2, C) VMEM zero-padded image scratch
    # x_ref           : (tile_m, 18C)  im2col scratch
    _, H, W, C = seg_ref.shape
    tile_m = out_ref.shape[1]
    t_h = tile_m // W
    t = pl.program_id(1)

    # Build the zero-padded image in VMEM once per image (row-tile t == 0);
    # padding happens inside the pipeline so only unpadded data crosses HBM.
    @pl.when(t == 0)
    def _():
        seg_pad_ref[...] = jnp.zeros_like(seg_pad_ref)
        dep_pad_ref[...] = jnp.zeros_like(dep_pad_ref)
        seg_pad_ref[1:H + 1, 1:W + 1, :] = seg_ref[0]
        dep_pad_ref[1:H + 1, 1:W + 1, :] = dep_ref[0]

    # im2col: stack 9 taps x {seg, dep} along K -> (tile_m, 18C).
    row0 = pl.multiple_of(t * t_h, t_h)
    for dy in range(3):
        seg_band = seg_pad_ref[pl.ds(row0 + dy, t_h), :, :]   # (t_h, W+2, C)
        dep_band = dep_pad_ref[pl.ds(row0 + dy, t_h), :, :]
        for dx in range(3):
            k = dy * 3 + dx
            c0 = 2 * k * C
            x_ref[:, c0:c0 + C] = (
                seg_band[:, dx:dx + W, :].reshape(tile_m, C))
            x_ref[:, c0 + C:c0 + 2 * C] = (
                dep_band[:, dx:dx + W, :].reshape(tile_m, C))

    x = x_ref[...]                                             # (tile_m, 18C)
    # One MXU matmul computes all four convolutions for this row tile:
    #   y[:, :C]  = conv_s_1(seg) + conv_s_2(dep)
    #   y[:, C:]  = conv_d_1(dep) + conv_d_2(seg)
    y = jnp.dot(x, w_ref[...], preferred_element_type=jnp.float32)

    # Residual = interior pixels = centre tap (dy=1, dx=1) im2col columns.
    c_center = 2 * 4 * C
    resid = x[:, c_center:c_center + 2 * C]                    # [seg | dep]

    out_ref[0] = y + b_ref[...] + resid


def _pick_row_tile(H, W, target_m=512):
    """Largest row tile th such that H % th == 0, (th*W) % 8 == 0 and
    th*W <= target_m (per-step M ~512 amortizes grid overhead on v6e;
    use target_m=256 to halve per-step footprint for v7x's 64 MiB VMEM)."""
    best = None
    for th in range(1, H + 1):
        if H % th == 0 and (th * W) % 8 == 0 and th * W <= target_m:
            best = th
    return H if best is None else best


def cross_propagation_unit(img_seg_nchw, img_depth_nchw, params, *,
                           row_tile=None):
    """params: w_{s1,s2,d1,d2} of shape (3,3,Cin,Cout) (HWIO) and
    b_{s1,s2,d1,d2} of shape (C,). Inputs/outputs are NCHW (PyTorch conv
    convention); compute is NHWC internally. Returns (out_depth, out_seg)."""
    seg = jnp.transpose(img_seg_nchw, (0, 2, 3, 1)).astype(jnp.float32)
    dep = jnp.transpose(img_depth_nchw, (0, 2, 3, 1)).astype(jnp.float32)
    N, H, W, C = seg.shape

    if row_tile is None:
        row_tile = _pick_row_tile(H, W)
    assert H % row_tile == 0, "row_tile must divide H"
    tile_m = row_tile * W
    assert tile_m % 8 == 0 or row_tile == H, "output tile must be 8-aligned"
    n_tiles = H // row_tile

    # Fused weights: rows ordered as [tap k][seg channels | dep channels],
    # cols ordered as [seg outputs | dep outputs].
    w_s1 = params["w_s1"].reshape(9, C, C).astype(jnp.float32)
    w_s2 = params["w_s2"].reshape(9, C, C).astype(jnp.float32)
    w_d1 = params["w_d1"].reshape(9, C, C).astype(jnp.float32)
    w_d2 = params["w_d2"].reshape(9, C, C).astype(jnp.float32)
    w_top = jnp.concatenate([w_s1, w_d2], axis=2)        # seg-input rows
    w_bot = jnp.concatenate([w_s2, w_d1], axis=2)        # dep-input rows
    w_full = jnp.concatenate([w_top, w_bot], axis=1).reshape(18 * C, 2 * C)
    b_full = jnp.concatenate([params["b_s1"] + params["b_s2"],
                              params["b_d1"] + params["b_d2"]]
                             ).reshape(1, 2 * C).astype(jnp.float32)

    grid = (N, n_tiles)
    in_specs = [
        pl.BlockSpec((1, H, W, C), lambda n, t: (n, 0, 0, 0)),   # seg
        pl.BlockSpec((1, H, W, C), lambda n, t: (n, 0, 0, 0)),   # dep
        pl.BlockSpec((18 * C, 2 * C), lambda n, t: (0, 0)),      # fused W
        pl.BlockSpec((1, 2 * C), lambda n, t: (0, 0)),           # fused bias
    ]
    out_specs = pl.BlockSpec((1, tile_m, 2 * C), lambda n, t: (n, t, 0))
    scratch_shapes = [
        pltpu.VMEM((H + 2, W + 2, C), jnp.float32),              # seg padded
        pltpu.VMEM((H + 2, W + 2, C), jnp.float32),              # dep padded
        pltpu.VMEM((tile_m, 18 * C), jnp.float32),               # im2col
    ]

    flops = 2 * N * H * W * (18 * C) * (2 * C)
    bytes_accessed = 4 * (2 * N * H * W * C          # two unpadded inputs
                          + N * H * W * 2 * C        # fused output
                          + 18 * C * 2 * C + 2 * C)  # weights + bias
    vmem_est = 4 * (2 * 2 * H * W * C                # 2 inputs, double-buffered
                    + 2 * (H + 2) * (W + 2) * C      # padded scratches
                    + 2 * 2 * tile_m * 2 * C         # output, double-buffered
                    + tile_m * 18 * C                # im2col scratch
                    + 18 * C * 2 * C + 2 * C)        # weights + bias
    vmem_limit = int(min(max(4 * vmem_est, 16 * 2 ** 20), 64 * 2 ** 20))

    out_fused = pl.pallas_call(
        _cross_prop_kernel,
        out_shape=jax.ShapeDtypeStruct((N, H * W, 2 * C), jnp.float32),
        grid_spec=pltpu.PrefetchScalarGridSpec(
            num_scalar_prefetch=0,
            grid=grid,
            in_specs=in_specs,
            out_specs=out_specs,
            scratch_shapes=scratch_shapes),
        compiler_params=pltpu.CompilerParams(
            dimension_semantics=("parallel", "arbitrary"),
            vmem_limit_bytes=vmem_limit),
        cost_estimate=pl.CostEstimate(flops=flops, transcendentals=0,
                                      bytes_accessed=bytes_accessed),
    )(seg, dep, w_full, b_full)

    out = out_fused.reshape(N, H, W, 2 * C)
    out_seg = jnp.transpose(out[..., :C], (0, 3, 1, 2))          # NCHW
    out_dep = jnp.transpose(out[..., C:], (0, 3, 1, 2))          # NCHW
    return out_dep, out_seg                                      # (depth, seg)


def _reference(img_seg_nchw, img_depth_nchw, params):
    """Pure-JAX reference (NHWC convs) for validation."""
    seg = jnp.transpose(img_seg_nchw, (0, 2, 3, 1))
    dep = jnp.transpose(img_depth_nchw, (0, 2, 3, 1))
    dn = ("NHWC", "HWIO", "NHWC")

    def conv(x, w, b):
        y = lax.conv_general_dilated(x, w, window_strides=(1, 1),
                                     padding=((1, 1), (1, 1)),
                                     dimension_numbers=dn)
        return y + b.reshape(1, 1, 1, -1)

    out_dep = (conv(dep, params["w_d1"], params["b_d1"]) +
               conv(seg, params["w_d2"], params["b_d2"]) + dep)
    out_seg = (conv(seg, params["w_s1"], params["b_s1"]) +
               conv(dep, params["w_s2"], params["b_s2"]) + seg)
    return (jnp.transpose(out_dep, (0, 3, 1, 2)),
            jnp.transpose(out_seg, (0, 3, 1, 2)))


def _init_params(key, channels):
    names = ["s1", "s2", "d1", "d2"]
    keys = jax.random.split(key, 2 * len(names))
    params = {}
    scale = 1.0 / (channels * 9) ** 0.5   # ~ PyTorch Conv2d default bound
    for i, n in enumerate(names):
        params[f"w_{n}"] = scale * jax.random.normal(
            keys[2 * i], (3, 3, channels, channels), jnp.float32)
        params[f"b_{n}"] = scale * jax.random.normal(
            keys[2 * i + 1], (channels,), jnp.float32)
    return params


if __name__ == "__main__":
    key = jax.random.PRNGKey(0)
    k_seg, k_dep, k_par = jax.random.split(key, 3)

    N, C, H, W = 2, 4, 16, 16                      # NCHW, PyTorch convention
    img_seg = jax.random.normal(k_seg, (N, C, H, W), jnp.float32)
    img_depth = jax.random.normal(k_dep, (N, C, H, W), jnp.float32)
    params = _init_params(k_par, C)

    ref_depth, ref_seg = _reference(img_seg, img_depth, params)

    # multi-row-tile path (2 tiles of 8 rows per image)
    out_depth, out_seg = cross_propagation_unit(img_seg, img_depth, params,
                                                row_tile=8)
    out_depth = jax.block_until_ready(out_depth)
    out_seg = jax.block_until_ready(out_seg)
    assert out_depth.shape == (N, C, H, W) and out_seg.shape == (N, C, H, W)
    assert jnp.allclose(out_depth, ref_depth, atol=1e-4, rtol=1e-4)
    assert jnp.allclose(out_seg, ref_seg, atol=1e-4, rtol=1e-4)

    # default (auto-picked) row tile path
    out_depth2, out_seg2 = cross_propagation_unit(img_seg, img_depth, params)
    out_depth2 = jax.block_until_ready(out_depth2)
    out_seg2 = jax.block_until_ready(out_seg2)
    assert jnp.allclose(out_depth2, ref_depth, atol=1e-4, rtol=1e-4)
    assert jnp.allclose(out_seg2, ref_seg, atol=1e-4, rtol=1e-4)

    print("KERNEL_OK")
</pallas_src>

<mosaic_0001>
module attributes {stable_mosaic.version = 11 : i64} {
  func.func @_cross_prop_kernel(%arg0: i32, %arg1: i32, %arg2: memref<1x16x16x4xf32, #tpu.memory_space<vmem>>, %arg3: memref<1x16x16x4xf32, #tpu.memory_space<vmem>>, %arg4: memref<72x8xf32, #tpu.memory_space<vmem>>, %arg5: memref<1x8xf32, #tpu.memory_space<vmem>>, %arg6: memref<1x128x8xf32, #tpu.memory_space<vmem>>, %arg7: memref<18x18x4xf32, #tpu.memory_space<vmem>>, %arg8: memref<18x18x4xf32, #tpu.memory_space<vmem>>, %arg9: memref<128x72xf32, #tpu.memory_space<vmem>>) attributes {dimension_semantics = [#tpu.dimension_semantics<parallel>, #tpu.dimension_semantics<arbitrary>], iteration_bounds = array<i64: 2, 2>, scalar_prefetch = 0 : i64, scratch_operands = 3 : i64, tpu.core_type = #tpu.core_type<tc>, window_params = [{transform_indices = @transform_0, window_bounds = array<i64: 1, 16, 16, 4>}, {transform_indices = @transform_1, window_bounds = array<i64: 1, 16, 16, 4>}, {pipeline_mode = #tpu.pipeline_mode<synchronous>, transform_indices = @transform_2, window_bounds = array<i64: 72, 8>}, {pipeline_mode = #tpu.pipeline_mode<synchronous>, transform_indices = @transform_3, window_bounds = array<i64: 1, 8>}, {transform_indices = @transform_4, window_bounds = array<i64: 1, 128, 8>}]} {
    %c0_i32 = arith.constant 0 : i32
    %0 = arith.cmpi eq, %arg1, %c0_i32 : i32
    %1 = arith.extui %0 : i1 to i32
    %c0_i32_0 = arith.constant 0 : i32
    %2 = arith.cmpi ne, %1, %c0_i32_0 : i32
    scf.if %2 {
      %cst_44 = arith.constant 0.000000e+00 : f32
      %88 = vector.broadcast %cst_44 : f32 to vector<18x18x4xf32>
      %c0_45 = arith.constant 0 : index
      %c0_46 = arith.constant 0 : index
      %c0_47 = arith.constant 0 : index
      %89 = vector.load %arg7[%c0_45, %c0_46, %c0_47] : memref<18x18x4xf32, #tpu.memory_space<vmem>>, vector<18x18x4xf32>
      tpu.vector_store %arg7[%c0_45, %c0_46, %c0_47], %88 {strides = array<i32>} : memref<18x18x4xf32, #tpu.memory_space<vmem>>, vector<18x18x4xf32>,
      %cst_48 = arith.constant 0.000000e+00 : f32
      %90 = vector.broadcast %cst_48 : f32 to vector<18x18x4xf32>
      %c0_49 = arith.constant 0 : index
      %c0_50 = arith.constant 0 : index
      %c0_51 = arith.constant 0 : index
      %91 = vector.load %arg8[%c0_49, %c0_50, %c0_51] : memref<18x18x4xf32, #tpu.memory_space<vmem>>, vector<18x18x4xf32>
      tpu.vector_store %arg8[%c0_49, %c0_50, %c0_51], %90 {strides = array<i32>} : memref<18x18x4xf32, #tpu.memory_space<vmem>>, vector<18x18x4xf32>,
      %c0_52 = arith.constant 0 : index
      %c0_53 = arith.constant 0 : index
      %c0_54 = arith.constant 0 : index
      %c0_55 = arith.constant 0 : index
      %92 = vector.load %arg2[%c0_52, %c0_53, %c0_54, %c0_55] : memref<1x16x16x4xf32, #tpu.memory_space<vmem>>, vector<1x16x16x4xf32>
      %93 = vector.shape_cast %92 : vector<1x16x16x4xf32> to vector<16x16x4xf32>
      %c1 = arith.constant 1 : index
      %c1_56 = arith.constant 1 : index
      %c0_57 = arith.constant 0 : index
      %94 = vector.load %arg7[%c1, %c1_56, %c0_57] : memref<18x18x4xf32, #tpu.memory_space<vmem>>, vector<16x16x4xf32>
      tpu.vector_store %arg7[%c1, %c1_56, %c0_57], %93 {strides = array<i32>} : memref<18x18x4xf32, #tpu.memory_space<vmem>>, vector<16x16x4xf32>,
      %c0_58 = arith.constant 0 : index
      %c0_59 = arith.constant 0 : index
      %c0_60 = arith.constant 0 : index
      %c0_61 = arith.constant 0 : index
      %95 = vector.load %arg3[%c0_58, %c0_59, %c0_60, %c0_61] : memref<1x16x16x4xf32, #tpu.memory_space<vmem>>, vector<1x16x16x4xf32>
      %96 = vector.shape_cast %95 : vector<1x16x16x4xf32> to vector<16x16x4xf32>
      %c1_62 = arith.constant 1 : index
      %c1_63 = arith.constant 1 : index
      %c0_64 = arith.constant 0 : index
      %97 = vector.load %arg8[%c1_62, %c1_63, %c0_64] : memref<18x18x4xf32, #tpu.memory_space<vmem>>, vector<16x16x4xf32>
      tpu.vector_store %arg8[%c1_62, %c1_63, %c0_64], %96 {strides = array<i32>} : memref<18x18x4xf32, #tpu.memory_space<vmem>>, vector<16x16x4xf32>,
    } else {
    }
    %c8_i32 = arith.constant 8 : i32
    %3 = arith.muli %arg1, %c8_i32 : i32
    %4 = tpu.assume_multiple %3, 8 : i32
    %c0_i32_1 = arith.constant 0 : i32
    %5 = arith.addi %4, %c0_i32_1 : i32
    %6 = arith.index_cast %5 : i32 to index
    %c0 = arith.constant 0 : index
    %c0_2 = arith.constant 0 : index
    %7 = vector.load %arg7[%6, %c0, %c0_2] : memref<18x18x4xf32, #tpu.memory_space<vmem>>, vector<8x18x4xf32>
    %c0_i32_3 = arith.constant 0 : i32
    %8 = arith.addi %4, %c0_i32_3 : i32
    %9 = arith.index_cast %8 : i32 to index
    %c0_4 = arith.constant 0 : index
    %c0_5 = arith.constant 0 : index
    %10 = vector.load %arg8[%9, %c0_4, %c0_5] : memref<18x18x4xf32, #tpu.memory_space<vmem>>, vector<8x18x4xf32>
    %11 = vector.extract_strided_slice %7 {offsets = [0, 0, 0], sizes = [8, 16, 4], strides = [1, 1, 1]} : vector<8x18x4xf32> to vector<8x16x4xf32>
    %12 = vector.shape_cast %11 : vector<8x16x4xf32> to vector<128x4xf32>
    %c0_6 = arith.constant 0 : index
    %c0_7 = arith.constant 0 : index
    %13 = vector.load %arg9[%c0_6, %c0_7] : memref<128x72xf32, #tpu.memory_space<vmem>>, vector<128x4xf32>
    tpu.vector_store %arg9[%c0_6, %c0_7], %12 {strides = array<i32>} : memref<128x72xf32, #tpu.memory_space<vmem>>, vector<128x4xf32>,
    %14 = vector.extract_strided_slice %10 {offsets = [0, 0, 0], sizes = [8, 16, 4], strides = [1, 1, 1]} : vector<8x18x4xf32> to vector<8x16x4xf32>
    %15 = vector.shape_cast %14 : vector<8x16x4xf32> to vector<128x4xf32>
    %c0_8 = arith.constant 0 : index
    %c4 = arith.constant 4 : index
    %16 = vector.load %arg9[%c0_8, %c4] : memref<128x72xf32, #tpu.memory_space<vmem>>, vector<128x4xf32>
    tpu.vector_store %arg9[%c0_8, %c4], %15 {strides = array<i32>} : memref<128x72xf32, #tpu.memory_space<vmem>>, vector<128x4xf32>,
    %17 = vector.extract_strided_slice %7 {offsets = [0, 1, 0], sizes = [8, 16, 4], strides = [1, 1, 1]} : vector<8x18x4xf32> to vector<8x16x4xf32>
    %18 = vector.shape_cast %17 : vector<8x16x4xf32> to vector<128x4xf32>
    %c0_9 = arith.constant 0 : index
    %c8 = arith.constant 8 : index
    %19 = vector.load %arg9[%c0_9, %c8] : memref<128x72xf32, #tpu.memory_space<vmem>>, vector<128x4xf32>
    tpu.vector_store %arg9[%c0_9, %c8], %18 {strides = array<i32>} : memref<128x72xf32, #tpu.memory_space<vmem>>, vector<128x4xf32>,
    %20 = vector.extract_strided_slice %10 {offsets = [0, 1, 0], sizes = [8, 16, 4], strides = [1, 1, 1]} : vector<8x18x4xf32> to vector<8x16x4xf32>
    %21 = vector.shape_cast %20 : vector<8x16x4xf32> to vector<128x4xf32>
    %c0_10 = arith.constant 0 : index
    %c12 = arith.constant 12 : index
    %22 = vector.load %arg9[%c0_10, %c12] : memref<128x72xf32, #tpu.memory_space<vmem>>, vector<128x4xf32>
    tpu.vector_store %arg9[%c0_10, %c12], %21 {strides = array<i32>} : memref<128x72xf32, #tpu.memory_space<vmem>>, vector<128x4xf32>,
    %23 = vector.extract_strided_slice %7 {offsets = [0, 2, 0], sizes = [8, 16, 4], strides = [1, 1, 1]} : vector<8x18x4xf32> to vector<8x16x4xf32>
    %24 = vector.shape_cast %23 : vector<8x16x4xf32> to vector<128x4xf32>
    %c0_11 = arith.constant 0 : index
    %c16 = arith.constant 16 : index
    %25 = vector.load %arg9[%c0_11, %c16] : memref<128x72xf32, #tpu.memory_space<vmem>>, vector<128x4xf32>
    tpu.vector_store %arg9[%c0_11, %c16], %24 {strides = array<i32>} : memref<128x72xf32, #tpu.memory_space<vmem>>, vector<128x4xf32>,
    %26 = vector.extract_strided_slice %10 {offsets = [0, 2, 0], sizes = [8, 16, 4], strides = [1, 1, 1]} : vector<8x18x4xf32> to vector<8x16x4xf32>
    %27 = vector.shape_cast %26 : vector<8x16x4xf32> to vector<128x4xf32>
    %c0_12 = arith.constant 0 : index
    %c20 = arith.constant 20 : index
    %28 = vector.load %arg9[%c0_12, %c20] : memref<128x72xf32, #tpu.memory_space<vmem>>, vector<128x4xf32>
    tpu.vector_store %arg9[%c0_12, %c20], %27 {strides = array<i32>} : memref<128x72xf32, #tpu.memory_space<vmem>>, vector<128x4xf32>,
    %c1_i32 = arith.constant 1 : i32
    %29 = arith.addi %4, %c1_i32 : i32
    %30 = arith.index_cast %29 : i32 to index
    %c0_13 = arith.constant 0 : index
    %c0_14 = arith.constant 0 : index
    %31 = vector.load %arg7[%30, %c0_13, %c0_14] : memref<18x18x4xf32, #tpu.memory_space<vmem>>, vector<8x18x4xf32>
    %c1_i32_15 = arith.constant 1 : i32
    %32 = arith.addi %4, %c1_i32_15 : i32
    %33 = arith.index_cast %32 : i32 to index
    %c0_16 = arith.constant 0 : index
    %c0_17 = arith.constant 0 : index
    %34 = vector.load %arg8[%33, %c0_16, %c0_17] : memref<18x18x4xf32, #tpu.memory_space<vmem>>, vector<8x18x4xf32>
    %35 = vector.extract_strided_slice %31 {offsets = [0, 0, 0], sizes = [8, 16, 4], strides = [1, 1, 1]} : vector<8x18x4xf32> to vector<8x16x4xf32>
    %36 = vector.shape_cast %35 : vector<8x16x4xf32> to vector<128x4xf32>
    %c0_18 = arith.constant 0 : index
    %c24 = arith.constant 24 : index
    %37 = vector.load %arg9[%c0_18, %c24] : memref<128x72xf32, #tpu.memory_space<vmem>>, vector<128x4xf32>
    tpu.vector_store %arg9[%c0_18, %c24], %36 {strides = array<i32>} : memref<128x72xf32, #tpu.memory_space<vmem>>, vector<128x4xf32>,
    %38 = vector.extract_strided_slice %34 {offsets = [0, 0, 0], sizes = [8, 16, 4], strides = [1, 1, 1]} : vector<8x18x4xf32> to vector<8x16x4xf32>
    %39 = vector.shape_cast %38 : vector<8x16x4xf32> to vector<128x4xf32>
    %c0_19 = arith.constant 0 : index
    %c28 = arith.constant 28 : index
    %40 = vector.load %arg9[%c0_19, %c28] : memref<128x72xf32, #tpu.memory_space<vmem>>, vector<128x4xf32>
    tpu.vector_store %arg9[%c0_19, %c28], %39 {strides = array<i32>} : memref<128x72xf32, #tpu.memory_space<vmem>>, vector<128x4xf32>,
    %41 = vector.extract_strided_slice %31 {offsets = [0, 1, 0], sizes = [8, 16, 4], strides = [1, 1, 1]} : vector<8x18x4xf32> to vector<8x16x4xf32>
    %42 = vector.shape_cast %41 : vector<8x16x4xf32> to vector<128x4xf32>
    %c0_20 = arith.constant 0 : index
    %c32 = arith.constant 32 : index
    %43 = vector.load %arg9[%c0_20, %c32] : memref<128x72xf32, #tpu.memory_space<vmem>>, vector<128x4xf32>
    tpu.vector_store %arg9[%c0_20, %c32], %42 {strides = array<i32>} : memref<128x72xf32, #tpu.memory_space<vmem>>, vector<128x4xf32>,
    %44 = vector.extract_strided_slice %34 {offsets = [0, 1, 0], sizes = [8, 16, 4], strides = [1, 1, 1]} : vector<8x18x4xf32> to vector<8x16x4xf32>
    %45 = vector.shape_cast %44 : vector<8x16x4xf32> to vector<128x4xf32>
    %c0_21 = arith.constant 0 : index
    %c36 = arith.constant 36 : index
    %46 = vector.load %arg9[%c0_21, %c36] : memref<128x72xf32, #tpu.memory_space<vmem>>, vector<128x4xf32>
    tpu.vector_store %arg9[%c0_21, %c36], %45 {strides = array<i32>} : memref<128x72xf32, #tpu.memory_space<vmem>>, vector<128x4xf32>,
    %47 = vector.extract_strided_slice %31 {offsets = [0, 2, 0], sizes = [8, 16, 4], strides = [1, 1, 1]} : vector<8x18x4xf32> to vector<8x16x4xf32>
    %48 = vector.shape_cast %47 : vector<8x16x4xf32> to vector<128x4xf32>
    %c0_22 = arith.constant 0 : index
    %c40 = arith.constant 40 : index
    %49 = vector.load %arg9[%c0_22, %c40] : memref<128x72xf32, #tpu.memory_space<vmem>>, vector<128x4xf32>
    tpu.vector_store %arg9[%c0_22, %c40], %48 {strides = array<i32>} : memref<128x72xf32, #tpu.memory_space<vmem>>, vector<128x4xf32>,
    %50 = vector.extract_strided_slice %34 {offsets = [0, 2, 0], sizes = [8, 16, 4], strides = [1, 1, 1]} : vector<8x18x4xf32> to vector<8x16x4xf32>
    %51 = vector.shape_cast %50 : vector<8x16x4xf32> to vector<128x4xf32>
    %c0_23 = arith.constant 0 : index
    %c44 = arith.constant 44 : index
    %52 = vector.load %arg9[%c0_23, %c44] : memref<128x72xf32, #tpu.memory_space<vmem>>, vector<128x4xf32>
    tpu.vector_store %arg9[%c0_23, %c44], %51 {strides = array<i32>} : memref<128x72xf32, #tpu.memory_space<vmem>>, vector<128x4xf32>,
    %c2_i32 = arith.constant 2 : i32
    %53 = arith.addi %4, %c2_i32 : i32
    %54 = arith.index_cast %53 : i32 to index
    %c0_24 = arith.constant 0 : index
    %c0_25 = arith.constant 0 : index
    %55 = vector.load %arg7[%54, %c0_24, %c0_25] : memref<18x18x4xf32, #tpu.memory_space<vmem>>, vector<8x18x4xf32>
    %c2_i32_26 = arith.constant 2 : i32
    %56 = arith.addi %4, %c2_i32_26 : i32
    %57 = arith.index_cast %56 : i32 to index
    %c0_27 = arith.constant 0 : index
    %c0_28 = arith.constant 0 : index
    %58 = vector.load %arg8[%57, %c0_27, %c0_28] : memref<18x18x4xf32, #tpu.memory_space<vmem>>, vector<8x18x4xf32>
    %59 = vector.extract_strided_slice %55 {offsets = [0, 0, 0], sizes = [8, 16, 4], strides = [1, 1, 1]} : vector<8x18x4xf32> to vector<8x16x4xf32>
    %60 = vector.shape_cast %59 : vector<8x16x4xf32> to vector<128x4xf32>
    %c0_29 = arith.constant 0 : index
    %c48 = arith.constant 48 : index
    %61 = vector.load %arg9[%c0_29, %c48] : memref<128x72xf32, #tpu.memory_space<vmem>>, vector<128x4xf32>
    tpu.vector_store %arg9[%c0_29, %c48], %60 {strides = array<i32>} : memref<128x72xf32, #tpu.memory_space<vmem>>, vector<128x4xf32>,
    %62 = vector.extract_strided_slice %58 {offsets = [0, 0, 0], sizes = [8, 16, 4], strides = [1, 1, 1]} : vector<8x18x4xf32> to vector<8x16x4xf32>
    %63 = vector.shape_cast %62 : vector<8x16x4xf32> to vector<128x4xf32>
    %c0_30 = arith.constant 0 : index
    %c52 = arith.constant 52 : index
    %64 = vector.load %arg9[%c0_30, %c52] : memref<128x72xf32, #tpu.memory_space<vmem>>, vector<128x4xf32>
    tpu.vector_store %arg9[%c0_30, %c52], %63 {strides = array<i32>} : memref<128x72xf32, #tpu.memory_space<vmem>>, vector<128x4xf32>,
    %65 = vector.extract_strided_slice %55 {offsets = [0, 1, 0], sizes = [8, 16, 4], strides = [1, 1, 1]} : vector<8x18x4xf32> to vector<8x16x4xf32>
    %66 = vector.shape_cast %65 : vector<8x16x4xf32> to vector<128x4xf32>
    %c0_31 = arith.constant 0 : index
    %c56 = arith.constant 56 : index
    %67 = vector.load %arg9[%c0_31, %c56] : memref<128x72xf32, #tpu.memory_space<vmem>>, vector<128x4xf32>
    tpu.vector_store %arg9[%c0_31, %c56], %66 {strides = array<i32>} : memref<128x72xf32, #tpu.memory_space<vmem>>, vector<128x4xf32>,
    %68 = vector.extract_strided_slice %58 {offsets = [0, 1, 0], sizes = [8, 16, 4], strides = [1, 1, 1]} : vector<8x18x4xf32> to vector<8x16x4xf32>
    %69 = vector.shape_cast %68 : vector<8x16x4xf32> to vector<128x4xf32>
    %c0_32 = arith.constant 0 : index
    %c60 = arith.constant 60 : index
    %70 = vector.load %arg9[%c0_32, %c60] : memref<128x72xf32, #tpu.memory_space<vmem>>, vector<128x4xf32>
    tpu.vector_store %arg9[%c0_32, %c60], %69 {strides = array<i32>} : memref<128x72xf32, #tpu.memory_space<vmem>>, vector<128x4xf32>,
    %71 = vector.extract_strided_slice %55 {offsets = [0, 2, 0], sizes = [8, 16, 4], strides = [1, 1, 1]} : vector<8x18x4xf32> to vector<8x16x4xf32>
    %72 = vector.shape_cast %71 : vector<8x16x4xf32> to vector<128x4xf32>
    %c0_33 = arith.constant 0 : index
    %c64 = arith.constant 64 : index
    %73 = vector.load %arg9[%c0_33, %c64] : memref<128x72xf32, #tpu.memory_space<vmem>>, vector<128x4xf32>
    tpu.vector_store %arg9[%c0_33, %c64], %72 {strides = array<i32>} : memref<128x72xf32, #tpu.memory_space<vmem>>, vector<128x4xf32>,
    %74 = vector.extract_strided_slice %58 {offsets = [0, 2, 0], sizes = [8, 16, 4], strides = [1, 1, 1]} : vector<8x18x4xf32> to vector<8x16x4xf32>
    %75 = vector.shape_cast %74 : vector<8x16x4xf32> to vector<128x4xf32>
    %c0_34 = arith.constant 0 : index
    %c68 = arith.constant 68 : index
    %76 = vector.load %arg9[%c0_34, %c68] : memref<128x72xf32, #tpu.memory_space<vmem>>, vector<128x4xf32>
    tpu.vector_store %arg9[%c0_34, %c68], %75 {strides = array<i32>} : memref<128x72xf32, #tpu.memory_space<vmem>>, vector<128x4xf32>,
    %c0_35 = arith.constant 0 : index
    %c0_36 = arith.constant 0 : index
    %77 = vector.load %arg9[%c0_35, %c0_36] : memref<128x72xf32, #tpu.memory_space<vmem>>, vector<128x72xf32>
    %c0_37 = arith.constant 0 : index
    %c0_38 = arith.constant 0 : index
    %78 = vector.load %arg4[%c0_37, %c0_38] : memref<72x8xf32, #tpu.memory_space<vmem>>, vector<72x8xf32>
    %cst = arith.constant dense<0.000000e+00> : vector<128x8xf32>
    %79 = tpu.matmul %77, %78, %cst {dimension_numbers = #tpu.dot_dimension_numbers<[1], [0], [0], [1], [0, 0, 1, 1], [], []>} : vector<128x72xf32>, vector<72x8xf32>, vector<128x8xf32> -> vector<128x8xf32>
    %80 = vector.extract_strided_slice %77 {offsets = [0, 32], sizes = [128, 8], strides = [1, 1]} : vector<128x72xf32> to vector<128x8xf32>
    %c0_39 = arith.constant 0 : index
    %c0_40 = arith.constant 0 : index
    %81 = vector.load %arg5[%c0_39, %c0_40] : memref<1x8xf32, #tpu.memory_space<vmem>>, vector<1x8xf32>
    %82 = vector.broadcast %81 : vector<1x8xf32> to vector<128x8xf32>
    %83 = arith.addf %79, %82 : vector<128x8xf32>
    %84 = arith.addf %83, %80 : vector<128x8xf32>
    %c0_41 = arith.constant 0 : index
    %c0_42 = arith.constant 0 : index
    %c0_43 = arith.constant 0 : index
    %85 = vector.load %arg6[%c0_41, %c0_42, %c0_43] : memref<1x128x8xf32, #tpu.memory_space<vmem>>, vector<1x128x8xf32>
    %86 = vector.shape_cast %85 : vector<1x128x8xf32> to vector<128x8xf32>
    %87 = vector.shape_cast %84 : vector<128x8xf32> to vector<1x128x8xf32>
    tpu.vector_store %arg6[%c0_41, %c0_42, %c0_43], %87 {strides = array<i32>} : memref<1x128x8xf32, #tpu.memory_space<vmem>>, vector<1x128x8xf32>,
    return
  }
  func.func @transform_0(%arg0: i32, %arg1: i32) -> (i32, i32, i32, i32) {
    %c0_i32 = arith.constant 0 : i32
    %c0_i32_0 = arith.constant 0 : i32
    %c0_i32_1 = arith.constant 0 : i32
    %c0_i32_2 = arith.constant 0 : i32
    return %arg0, %c0_i32, %c0_i32_0, %c0_i32_1 : i32, i32, i32, i32
  }
  func.func @transform_1(%arg0: i32, %arg1: i32) -> (i32, i32, i32, i32) {
    %c0_i32 = arith.constant 0 : i32
    %c0_i32_0 = arith.constant 0 : i32
    %c0_i32_1 = arith.constant 0 : i32
    %c0_i32_2 = arith.constant 0 : i32
    return %arg0, %c0_i32, %c0_i32_0, %c0_i32_1 : i32, i32, i32, i32
  }
  func.func @transform_2(%arg0: i32, %arg1: i32) -> (i32, i32) {
    %c0_i32 = arith.constant 0 : i32
    %c0_i32_0 = arith.constant 0 : i32
    %c0_i32_1 = arith.constant 0 : i32
    return %c0_i32, %c0_i32_0 : i32, i32
  }
  func.func @transform_3(%arg0: i32, %arg1: i32) -> (i32, i32) {
    %c0_i32 = arith.constant 0 : i32
    %c0_i32_0 = arith.constant 0 : i32
    %c0_i32_1 = arith.constant 0 : i32
    return %c0_i32, %c0_i32_0 : i32, i32
  }
  func.func @transform_4(%arg0: i32, %arg1: i32) -> (i32, i32, i32) {
    %c0_i32 = arith.constant 0 : i32
    %c0_i32_0 = arith.constant 0 : i32
    return %arg0, %arg1, %c0_i32 : i32, i32, i32
  }
}

</mosaic_0001>

<llo_original>
// kernel: tpu_custom_call.1
$region0: #{tpu_custom_call.1}
  #allocation0 [shape = 'u32[]', space=smem, size = 0x4, offset = 0x4, fixed_abs, tag = 'smem constant byte address 0x4 - core index']
  #allocation1 [shape = 'u32[144,128]{1,0:T(1,128)}', space=vmem, size = 0x12000, scoped, tag = 'internal scratch']
  #allocation2 [shape = 'f32[18,18,4]{2,1,0:T(8,128)}', space=vmem, size = 0x36000, scoped, tag = 'scratch operand']
  #allocation3 [shape = 'f32[18,18,4]{2,1,0:T(8,128)}', space=vmem, size = 0x36000, scoped, tag = 'scratch operand']
  #allocation4 [shape = 'f32[128,72]{1,0:T(8,128)}', space=vmem, size = 0x10000, scoped, tag = 'scratch operand']
  %s0 = inlined_call_operand.vmem [shape: f32[2,16,16,4], index: 0, kind: input, shape index: {}]
  %s1 = inlined_call_operand.vmem [shape: f32[2,16,16,4], index: 1, kind: input, shape index: {}]
  %s2 = inlined_call_operand.vmem [shape: f32[72,8], index: 2, kind: input, shape index: {}]
  %s3 = inlined_call_operand.vmem [shape: f32[1,8], index: 3, kind: input, shape index: {}]
  %s4 = inlined_call_operand.vmem [shape: f32[2,256,8], index: 4, kind: output, shape index: {}]
  %s5 = sld [smem:[#allocation0]]
  $region53: #{tpu_custom_call.1} parent=0
    _
  %s7 = ssub.s32 1, %s5
  %s8 = scalar_select 0, %s7, %s5
  loop: start=0, step=1, limit=6
  $region2: #{tpu_custom_call.1} parent=0 // loop_pre_header
    _
  $region3: #{tpu_custom_call.1} parent=0 // loop_header
    %s10 = sphi 0, %s14
    %p11 = scmp.ge.s32.totalorder %s10, 6
    %s17 = sphi 0, %s29
    %s18 = sphi 0, %s25
    %s19 = sphi 0, %s17
    %s20 = sphi 0, %s18
    %s21 = sphi 0, %s19
    %s22 = sphi 0, %s20
    %s32 = sphi 0, %s34
    %s35 = sphi 0, %s32
    %s36 = sphi 0, %s35
    %s52 = sphi 0, %s36
    %s58 = sphi 0, %s60
    %s61 = sphi 0, %s58
    %s62 = sphi 0, %s61
    %s78 = sphi 0, %s62
    %s82 = sphi 0, %s82
    %s84 = sphi 0, %s82
    %s85 = sphi 0, %s84
    %s99 = sphi 0, %s85
    %s103 = sphi 0, %s103
    %s105 = sphi 0, %s103
    %s106 = sphi 0, %s105
    %s120 = sphi 0, %s106
    %s128 = sphi 0, %s130
    %s131 = sphi 0, %s128
    %s132 = sphi 0, %s131
    %s148 = sphi 0, %s132
  $region4: #{tpu_custom_call.1} parent=0 // loop_header_branch
    %13 = sbr.rel (%p11) target = $region8
  $region5: #{tpu_custom_call.1} parent=0 // loop_body
    %s15 = ssub.s32 %s10, 1
    %s16 = ssub.s32 %s10, 2
    %s23 = sadd.s32 1, %s18
    %p24 = scmp.ge.s32.totalorder %s23, 2
    %s25 = scalar_select %p24, 0, %s23
    %s26 = sadd.s32 1, %s17
    %s27 = scalar_select %p24, %s26, %s17
    %p28 = scmp.ge.s32.totalorder %s27, 2
    %s29 = scalar_select %p28, 0, %s27
    %s30 = ssub.s32 %s17, %s29
    %p31 = scmp.eq.s32.totalorder %s30, 0
    %s33 = sadd.s32 %s32, 1
    %s34 = scalar_select %p31, %s32, %s33
    %p37 = pneg %p31
    %p38 = scmp.eq.s32.totalorder %s10, 3
    %p39 = por %p37, %p38
    %p40 = scmp.ne.s32.totalorder %s32, %s35
    %p41 = scmp.eq.s32.totalorder %s10, 0
    %p42 = por %p40, %p41
    %p43 = scmp.ne.s32.totalorder %s32, %s35
    %p44 = scmp.eq.s32.totalorder %s15, 3
    %p45 = por %p43, %p44
    %p46 = scmp.ne.s32.totalorder %s35, %s36
    %p47 = scmp.eq.s32.totalorder %s15, 0
    %p48 = por %p46, %p47
    %p49 = scmp.ne.s32.totalorder %s35, %s36
    %p50 = scmp.eq.s32.totalorder %s16, 3
    %p51 = por %p49, %p50
    %p53 = scmp.ne.s32.totalorder %s36, %s52
    %p54 = scmp.eq.s32.totalorder %s16, 0
    %p55 = por %p53, %p54
    %s56 = ssub.s32 %s17, %s29
    %p57 = scmp.eq.s32.totalorder %s56, 0
    %s59 = sadd.s32 %s58, 1
    %s60 = scalar_select %p57, %s58, %s59
    %p63 = pneg %p57
    %p64 = scmp.eq.s32.totalorder %s10, 3
    %p65 = por %p63, %p64
    %p66 = scmp.ne.s32.totalorder %s58, %s61
    %p67 = scmp.eq.s32.totalorder %s10, 0
    %p68 = por %p66, %p67
    %p69 = scmp.ne.s32.totalorder %s58, %s61
    %p70 = scmp.eq.s32.totalorder %s15, 3
    %p71 = por %p69, %p70
    %p72 = scmp.ne.s32.totalorder %s61, %s62
    %p73 = scmp.eq.s32.totalorder %s15, 0
    %p74 = por %p72, %p73
    %p75 = scmp.ne.s32.totalorder %s61, %s62
    %p76 = scmp.eq.s32.totalorder %s16, 3
    %p77 = por %p75, %p76
    %p79 = scmp.ne.s32.totalorder %s62, %s78
    %p80 = scmp.eq.s32.totalorder %s16, 0
    %p81 = por %p79, %p80
    %s83 = sadd.s32 %s82, 1
    %p86 = scmp.eq.s32.totalorder %s10, 3
    %p87 = scmp.ne.s32.totalorder %s82, %s84
    %p88 = scmp.eq.s32.totalorder %s10, 0
    %p89 = por %p87, %p88
    %p90 = scmp.ne.s32.totalorder %s82, %s84
    %p91 = scmp.eq.s32.totalorder %s15, 3
    %p92 = por %p90, %p91
    %p93 = scmp.ne.s32.totalorder %s84, %s85
    %p94 = scmp.eq.s32.totalorder %s15, 0
    %p95 = por %p93, %p94
    %p96 = scmp.ne.s32.totalorder %s84, %s85
    %p97 = scmp.eq.s32.totalorder %s16, 3
    %p98 = por %p96, %p97
    %p100 = scmp.ne.s32.totalorder %s85, %s99
    %p101 = scmp.eq.s32.totalorder %s16, 0
    %p102 = por %p100, %p101
    %s104 = sadd.s32 %s103, 1
    %p107 = scmp.eq.s32.totalorder %s10, 3
    %p108 = scmp.ne.s32.totalorder %s103, %s105
    %p109 = scmp.eq.s32.totalorder %s10, 0
    %p110 = por %p108, %p109
    %p111 = scmp.ne.s32.totalorder %s103, %s105
    %p112 = scmp.eq.s32.totalorder %s15, 3
    %p113 = por %p111, %p112
    %p114 = scmp.ne.s32.totalorder %s105, %s106
    %p115 = scmp.eq.s32.totalorder %s15, 0
    %p116 = por %p114, %p115
    %p117 = scmp.ne.s32.totalorder %s105, %s106
    %p118 = scmp.eq.s32.totalorder %s16, 3
    %p119 = por %p117, %p118
    %p121 = scmp.ne.s32.totalorder %s106, %s120
    %p122 = scmp.eq.s32.totalorder %s16, 0
    %p123 = por %p121, %p122
    %s124 = ssub.s32 %s17, %s29
    %s125 = ssub.s32 %s18, %s25
    %s126 = sor.u32 %s124, %s125
    %p127 = scmp.eq.s32.totalorder %s126, 0
    %s129 = sadd.s32 %s128, 1
    %s130 = scalar_select %p127, %s128, %s129
    %p133 = pneg %p127
    %p134 = scmp.eq.s32.totalorder %s10, 3
    %p135 = por %p133, %p134
    %p136 = scmp.ne.s32.totalorder %s128, %s131
    %p137 = scmp.eq.s32.totalorder %s10, 0
    %p138 = por %p136, %p137
    %p139 = scmp.ne.s32.totalorder %s128, %s131
    %p140 = scmp.eq.s32.totalorder %s15, 3
    %p141 = por %p139, %p140
    %p142 = scmp.ne.s32.totalorder %s131, %s132
    %p143 = scmp.eq.s32.totalorder %s15, 0
    %p144 = por %p142, %p143
    %p145 = scmp.ne.s32.totalorder %s131, %s132
    %p146 = scmp.eq.s32.totalorder %s16, 3
    %p147 = por %p145, %p146
    %p149 = scmp.ne.s32.totalorder %s132, %s148
    %p150 = scmp.eq.s32.totalorder %s16, 0
    %p151 = por %p149, %p150
    %p152 = scmp.le.s32.totalorder 1, %s10
    %p153 = scmp.lt.s32.totalorder %s10, 5
    %p154 = pnand %p152, %p153
    %p155 = pneg %p154
    // Predicated region
    $region9: #{tpu_custom_call.1} parent=5 // pred_check
      _
    $region10: #{tpu_custom_call.1} parent=5 // pred_check_branch
      %157 = sbr.rel (%p154) target = $region12
    $region11: #{tpu_custom_call.1} parent=5 // pred_region
      %s158 = ssub.s32 %s10, 1
      // Predicated region
      $region13: #{tpu_custom_call.1} parent=11 // pred_check
        %p159 = pneg %p95
      $region14: #{tpu_custom_call.1} parent=11 // pred_check_branch
        %161 = sbr.rel (%p159) target = $region16
      $region15: #{tpu_custom_call.1} parent=11 // pred_region
        _
      $region16: #{tpu_custom_call.1} parent=11 // pred_fallthru
        _
      // Predicated region
      $region17: #{tpu_custom_call.1} parent=11 // pred_check
        %p162 = pneg %p116
      $region18: #{tpu_custom_call.1} parent=11 // pred_check_branch
        %164 = sbr.rel (%p162) target = $region20
      $region19: #{tpu_custom_call.1} parent=11 // pred_region
        _
      $region20: #{tpu_custom_call.1} parent=11 // pred_fallthru
        _
    $region12: #{tpu_custom_call.1} parent=5 // pred_fallthru
      _
    %p165 = scmp.lt.s32.totalorder %s10, 4
    // Predicated region
    $region21: #{tpu_custom_call.1} parent=5 // pred_check
      %p166 = pneg %p165
    $region22: #{tpu_custom_call.1} parent=5 // pred_check_branch
      %168 = sbr.rel (%p166) target = $region24
    $region23: #{tpu_custom_call.1} parent=5 // pred_region
      // Predicated region
      $region25: #{tpu_custom_call.1} parent=23 // pred_check
        %p169 = pneg %p42
      $region26: #{tpu_custom_call.1} parent=23 // pred_check_branch
        %171 = sbr.rel (%p169) target = $region28
      $region27: #{tpu_custom_call.1} parent=23 // pred_region
        %p172 = scmp.lt.s32.totalorder %s17, 1
        %s173 = scalar_select %p172, %s17, 1
        %s174 = smul.addr %s173, 32
        %s175 = smul.addr %s174, 8
        %s176 = scalar_lea.vmem %s0, %s175
      $region28: #{tpu_custom_call.1} parent=23 // pred_fallthru
        _
      // Predicated region
      $region29: #{tpu_custom_call.1} parent=23 // pred_check
        %p177 = pneg %p68
      $region30: #{tpu_custom_call.1} parent=23 // pred_check_branch
        %179 = sbr.rel (%p177) target = $region32
      $region31: #{tpu_custom_call.1} parent=23 // pred_region
        %p180 = scmp.lt.s32.totalorder %s17, 1
        %s181 = scalar_select %p180, %s17, 1
        %s182 = smul.addr %s181, 32
        %s183 = smul.addr %s182, 8
        %s184 = scalar_lea.vmem %s1, %s183
      $region32: #{tpu_custom_call.1} parent=23 // pred_fallthru
        _
    $region24: #{tpu_custom_call.1} parent=5 // pred_fallthru
      _
    %p185 = scmp.le.s32.totalorder 1, %s10
    %p186 = scmp.lt.s32.totalorder %s10, 5
    %p187 = pnand %p185, %p186
    %p188 = pneg %p187
    // Predicated region
    $region33: #{tpu_custom_call.1} parent=5 // pred_check
      _
    $region34: #{tpu_custom_call.1} parent=5 // pred_check_branch
      %190 = sbr.rel (%p187) target = $region36
    $region35: #{tpu_custom_call.1} parent=5 // pred_region
      %s191 = ssub.s32 %s10, 1
      %p192 = scmp.lt.s32.totalorder %s19, 1
      %s193 = scalar_select %p192, %s19, 1
      %s194 = smul.addr %s193, 32
      %s195 = smul.addr %s194, 8
      %s196 = scalar_lea.vmem %s0, %s195
      %p197 = pneg %p48
      %p198 = pneg %p45
      %p199 = scmp.lt.s32.totalorder %s19, 1
      %s200 = scalar_select %p199, %s19, 1
      %s201 = smul.addr %s200, 32
      %s202 = smul.addr %s201, 8
      %s203 = scalar_lea.vmem %s1, %s202
      %p204 = pneg %p74
      %p205 = pneg %p71
      %p206 = pneg %p95
      %p207 = pneg %p92
      %p208 = pneg %p116
      %p209 = pneg %p113
      %p210 = pneg %p144
      %p211 = pneg %p141
      %s212 = smul.u32 16, %s20
      %p213 = scmp.lt.s32.totalorder %s19, 1
      %s214 = scalar_select %p213, %s19, 1
      %p215 = scmp.lt.s32.totalorder %s212, 31
      %s216 = scalar_select %p215, %s212, 31
      %s217 = smul.addr %s214, 32
      %s218 = sadd.s32 %s216, %s217
      %s219 = smul.addr %s218, 8
      %s220 = scalar_lea.vmem %s4, %s219
      %p221 = scmp.lt.s32.totalorder %s19, 1
      %s222 = scalar_select %p221, %s19, 1
      %s223 = smul.addr %s222, 32
      %s224 = smul.addr %s223, 8
      %s225 = scalar_lea.vmem %s0, %s224
      %p226 = scmp.lt.s32.totalorder %s19, 1
      %s227 = scalar_select %p226, %s19, 1
      %s228 = smul.addr %s227, 32
      %s229 = smul.addr %s228, 8
      %s230 = scalar_lea.vmem %s1, %s229
      %s231 = smul.u32 16, %s20
      %p232 = scmp.lt.s32.totalorder %s19, 1
      %s233 = scalar_select %p232, %s19, 1
      %p234 = scmp.lt.s32.totalorder %s231, 31
      %s235 = scalar_select %p234, %s231, 31
      %s236 = smul.addr %s233, 32
      %s237 = sadd.s32 %s235, %s236
      %s238 = smul.addr %s237, 8
      %s239 = scalar_lea.vmem %s4, %s238
      %s240 = smul.u32 16, %s20
      %p241 = scmp.eq.s32.totalorder %s20, 0
      // Predicated region
      $region37: #{tpu_custom_call.1} parent=35 // pred_check
        %p242 = pneg %p241
      $region38: #{tpu_custom_call.1} parent=35 // pred_check_branch
        %244 = sbr.rel (%p242) target = $region40
      $region39: #{tpu_custom_call.1} parent=35 // pred_region
        %vm245 = vcmask 31744
        %246 = vst.msk [vmem:[#allocation2] sm:$0xff] %vm245, 0.0
        %247 = vst.msk [vmem:[#allocation2 + $0x8] sm:$0xff] %vm245, 0.0
        %vm248 = vcmask 25600
        %249 = vst.msk [vmem:[#allocation2 + $0x10] sm:$0x3] %vm248, 0.0
        %250 = vst.msk [vmem:[#allocation2 + $0x18] sm:$0xff] %vm245, 0.0
        %251 = vst.msk [vmem:[#allocation2 + $0x20] sm:$0xff] %vm245, 0.0
        %252 = vst.msk [vmem:[#allocation2 + $0x28] sm:$0x3] %vm248, 0.0
        %253 = vst.msk [vmem:[#allocation2 + $0x30] sm:$0xff] %vm245, 0.0
        %254 = vst.msk [vmem:[#allocation2 + $0x38] sm:$0xff] %vm245, 0.0
        %255 = vst.msk [vmem:[#allocation2 + $0x40] sm:$0x3] %vm248, 0.0
        %256 = vst.msk [vmem:[#allocation2 + $0x48] sm:$0xff] %vm245, 0.0
        %257 = vst.msk [vmem:[#allocation2 + $0x50] sm:$0xff] %vm245, 0.0
        %258 = vst.msk [vmem:[#allocation2 + $0x58] sm:$0x3] %vm248, 0.0
        %259 = vst.msk [vmem:[#allocation2 + $0x60] sm:$0xff] %vm245, 0.0
        %260 = vst.msk [vmem:[#allocation2 + $0x68] sm:$0xff] %vm245, 0.0
        %261 = vst.msk [vmem:[#allocation2 + $0x70] sm:$0x3] %vm248, 0.0
        %262 = vst.msk [vmem:[#allocation2 + $0x78] sm:$0xff] %vm245, 0.0
        %263 = vst.msk [vmem:[#allocation2 + $0x80] sm:$0xff] %vm245, 0.0
        %264 = vst.msk [vmem:[#allocation2 + $0x88] sm:$0x3] %vm248, 0.0
        %265 = vst.msk [vmem:[#allocation2 + $0x90] sm:$0xff] %vm245, 0.0
        %266 = vst.msk [vmem:[#allocation2 + $0x98] sm:$0xff] %vm245, 0.0
        %267 = vst.msk [vmem:[#allocation2 + $0xa0] sm:$0x3] %vm248, 0.0
        %268 = vst.msk [vmem:[#allocation2 + $0xa8] sm:$0xff] %vm245, 0.0
        %269 = vst.msk [vmem:[#allocation2 + $0xb0] sm:$0xff] %vm245, 0.0
        %270 = vst.msk [vmem:[#allocation2 + $0xb8] sm:$0x3] %vm248, 0.0
        %271 = vst.msk [vmem:[#allocation2 + $0xc0] sm:$0xff] %vm245, 0.0
        %272 = vst.msk [vmem:[#allocation2 + $0xc8] sm:$0xff] %vm245, 0.0
        %273 = vst.msk [vmem:[#allocation2 + $0xd0] sm:$0x3] %vm248, 0.0
        %274 = vst.msk [vmem:[#allocation2 + $0xd8] sm:$0xff] %vm245, 0.0
        %275 = vst.msk [vmem:[#allocation2 + $0xe0] sm:$0xff] %vm245, 0.0
        %276 = vst.msk [vmem:[#allocation2 + $0xe8] sm:$0x3] %vm248, 0.0
        %277 = vst.msk [vmem:[#allocation2 + $0xf0] sm:$0xff] %vm245, 0.0
        %278 = vst.msk [vmem:[#allocation2 + $0xf8] sm:$0xff] %vm245, 0.0
        %279 = vst.msk [vmem:[#allocation2 + $0x100] sm:$0x3] %vm248, 0.0
        %280 = vst.msk [vmem:[#allocation2 + $0x108] sm:$0xff] %vm245, 0.0
        %281 = vst.msk [vmem:[#allocation2 + $0x110] sm:$0xff] %vm245, 0.0
        %282 = vst.msk [vmem:[#allocation2 + $0x118] sm:$0x3] %vm248, 0.0
        %283 = vst.msk [vmem:[#allocation2 + $0x120] sm:$0xff] %vm245, 0.0
        %284 = vst.msk [vmem:[#allocation2 + $0x128] sm:$0xff] %vm245, 0.0
        %285 = vst.msk [vmem:[#allocation2 + $0x130] sm:$0x3] %vm248, 0.0
        %286 = vst.msk [vmem:[#allocation2 + $0x138] sm:$0xff] %vm245, 0.0
        %287 = vst.msk [vmem:[#allocation2 + $0x140] sm:$0xff] %vm245, 0.0
        %288 = vst.msk [vmem:[#allocation2 + $0x148] sm:$0x3] %vm248, 0.0
        %289 = vst.msk [vmem:[#allocation2 + $0x150] sm:$0xff] %vm245, 0.0
        %290 = vst.msk [vmem:[#allocation2 + $0x158] sm:$0xff] %vm245, 0.0
        %291 = vst.msk [vmem:[#allocation2 + $0x160] sm:$0x3] %vm248, 0.0
        %292 = vst.msk [vmem:[#allocation2 + $0x168] sm:$0xff] %vm245, 0.0
        %293 = vst.msk [vmem:[#allocation2 + $0x170] sm:$0xff] %vm245, 0.0
        %294 = vst.msk [vmem:[#allocation2 + $0x178] sm:$0x3] %vm248, 0.0
        %295 = vst.msk [vmem:[#allocation2 + $0x180] sm:$0xff] %vm245, 0.0
        %296 = vst.msk [vmem:[#allocation2 + $0x188] sm:$0xff] %vm245, 0.0
        %297 = vst.msk [vmem:[#allocation2 + $0x190] sm:$0x3] %vm248, 0.0
        %298 = vst.msk [vmem:[#allocation2 + $0x198] sm:$0xff] %vm245, 0.0
        %299 = vst.msk [vmem:[#allocation2 + $0x1a0] sm:$0xff] %vm245, 0.0
        %300 = vst.msk [vmem:[#allocation2 + $0x1a8] sm:$0x3] %vm248, 0.0
        %301 = vst.msk [vmem:[#allocation3] sm:$0xff] %vm245, 0.0
        %302 = vst.msk [vmem:[#allocation3 + $0x8] sm:$0xff] %vm245, 0.0
        %303 = vst.msk [vmem:[#allocation3 + $0x10] sm:$0x3] %vm248, 0.0
        %304 = vst.msk [vmem:[#allocation3 + $0x18] sm:$0xff] %vm245, 0.0
        %305 = vst.msk [vmem:[#allocation3 + $0x20] sm:$0xff] %vm245, 0.0
        %306 = vst.msk [vmem:[#allocation3 + $0x28] sm:$0x3] %vm248, 0.0
        %307 = vst.msk [vmem:[#allocation3 + $0x30] sm:$0xff] %vm245, 0.0
        %308 = vst.msk [vmem:[#allocation3 + $0x38] sm:$0xff] %vm245, 0.0
        %309 = vst.msk [vmem:[#allocation3 + $0x40] sm:$0x3] %vm248, 0.0
        %310 = vst.msk [vmem:[#allocation3 + $0x48] sm:$0xff] %vm245, 0.0
        %311 = vst.msk [vmem:[#allocation3 + $0x50] sm:$0xff] %vm245, 0.0
        %312 = vst.msk [vmem:[#allocation3 + $0x58] sm:$0x3] %vm248, 0.0
        %313 = vst.msk [vmem:[#allocation3 + $0x60] sm:$0xff] %vm245, 0.0
        %314 = vst.msk [vmem:[#allocation3 + $0x68] sm:$0xff] %vm245, 0.0
        %315 = vst.msk [vmem:[#allocation3 + $0x70] sm:$0x3] %vm248, 0.0
        %316 = vst.msk [vmem:[#allocation3 + $0x78] sm:$0xff] %vm245, 0.0
        %317 = vst.msk [vmem:[#allocation3 + $0x80] sm:$0xff] %vm245, 0.0
        %318 = vst.msk [vmem:[#allocation3 + $0x88] sm:$0x3] %vm248, 0.0
        %319 = vst.msk [vmem:[#allocation3 + $0x90] sm:$0xff] %vm245, 0.0
        %320 = vst.msk [vmem:[#allocation3 + $0x98] sm:$0xff] %vm245, 0.0
        %321 = vst.msk [vmem:[#allocation3 + $0xa0] sm:$0x3] %vm248, 0.0
        %322 = vst.msk [vmem:[#allocation3 + $0xa8] sm:$0xff] %vm245, 0.0
        %323 = vst.msk [vmem:[#allocation3 + $0xb0] sm:$0xff] %vm245, 0.0
        %324 = vst.msk [vmem:[#allocation3 + $0xb8] sm:$0x3] %vm248, 0.0
        %325 = vst.msk [vmem:[#allocation3 + $0xc0] sm:$0xff] %vm245, 0.0
        %326 = vst.msk [vmem:[#allocation3 + $0xc8] sm:$0xff] %vm245, 0.0
        %327 = vst.msk [vmem:[#allocation3 + $0xd0] sm:$0x3] %vm248, 0.0
        %328 = vst.msk [vmem:[#allocation3 + $0xd8] sm:$0xff] %vm245, 0.0
        %329 = vst.msk [vmem:[#allocation3 + $0xe0] sm:$0xff] %vm245, 0.0
        %330 = vst.msk [vmem:[#allocation3 + $0xe8] sm:$0x3] %vm248, 0.0
        %331 = vst.msk [vmem:[#allocation3 + $0xf0] sm:$0xff] %vm245, 0.0
        %332 = vst.msk [vmem:[#allocation3 + $0xf8] sm:$0xff] %vm245, 0.0
        %333 = vst.msk [vmem:[#allocation3 + $0x100] sm:$0x3] %vm248, 0.0
        %334 = vst.msk [vmem:[#allocation3 + $0x108] sm:$0xff] %vm245, 0.0
        %335 = vst.msk [vmem:[#allocation3 + $0x110] sm:$0xff] %vm245, 0.0
        %336 = vst.msk [vmem:[#allocation3 + $0x118] sm:$0x3] %vm248, 0.0
        %337 = vst.msk [vmem:[#allocation3 + $0x120] sm:$0xff] %vm245, 0.0
        %338 = vst.msk [vmem:[#allocation3 + $0x128] sm:$0xff] %vm245, 0.0
        %339 = vst.msk [vmem:[#allocation3 + $0x130] sm:$0x3] %vm248, 0.0
        %340 = vst.msk [vmem:[#allocation3 + $0x138] sm:$0xff] %vm245, 0.0
        %341 = vst.msk [vmem:[#allocation3 + $0x140] sm:$0xff] %vm245, 0.0
        %342 = vst.msk [vmem:[#allocation3 + $0x148] sm:$0x3] %vm248, 0.0
        %343 = vst.msk [vmem:[#allocation3 + $0x150] sm:$0xff] %vm245, 0.0
        %344 = vst.msk [vmem:[#allocation3 + $0x158] sm:$0xff] %vm245, 0.0
        %345 = vst.msk [vmem:[#allocation3 + $0x160] sm:$0x3] %vm248, 0.0
        %346 = vst.msk [vmem:[#allocation3 + $0x168] sm:$0xff] %vm245, 0.0
        %347 = vst.msk [vmem:[#allocation3 + $0x170] sm:$0xff] %vm245, 0.0
        %348 = vst.msk [vmem:[#allocation3 + $0x178] sm:$0x3] %vm248, 0.0
        %349 = vst.msk [vmem:[#allocation3 + $0x180] sm:$0xff] %vm245, 0.0
        %350 = vst.msk [vmem:[#allocation3 + $0x188] sm:$0xff] %vm245, 0.0
        %351 = vst.msk [vmem:[#allocation3 + $0x190] sm:$0x3] %vm248, 0.0
        %352 = vst.msk [vmem:[#allocation3 + $0x198] sm:$0xff] %vm245, 0.0
        %353 = vst.msk [vmem:[#allocation3 + $0x1a0] sm:$0xff] %vm245, 0.0
        %354 = vst.msk [vmem:[#allocation3 + $0x1a8] sm:$0x3] %vm248, 0.0
        %v355 = vld [vmem:[%s225] sm:$0xff]
        %v356 = vld [vmem:[%s225 + $0x8] sm:$0xff]
        %v357 = vld [vmem:[%s225 + $0x10] sm:$0xff]
        %v358 = vld [vmem:[%s225 + $0x18] sm:$0xff]
        %v359 = vld [vmem:[%s225 + $0x20] sm:$0xff]
        %v360 = vld [vmem:[%s225 + $0x28] sm:$0xff]
        %v361 = vld [vmem:[%s225 + $0x30] sm:$0xff]
        %v362 = vld [vmem:[%s225 + $0x38] sm:$0xff]
        %v363 = vld [vmem:[%s225 + $0x40] sm:$0xff]
        %v364 = vld [vmem:[%s225 + $0x48] sm:$0xff]
        %v365 = vld [vmem:[%s225 + $0x50] sm:$0xff]
        %v366 = vld [vmem:[%s225 + $0x58] sm:$0xff]
        %v367 = vld [vmem:[%s225 + $0x60] sm:$0xff]
        %v368 = vld [vmem:[%s225 + $0x68] sm:$0xff]
        %v369 = vld [vmem:[%s225 + $0x70] sm:$0xff]
        %v370 = vld [vmem:[%s225 + $0x78] sm:$0xff]
        %v371 = vld [vmem:[%s225 + $0x80] sm:$0xff]
        %v372 = vld [vmem:[%s225 + $0x88] sm:$0xff]
        %v373 = vld [vmem:[%s225 + $0x90] sm:$0xff]
        %v374 = vld [vmem:[%s225 + $0x98] sm:$0xff]
        %v375 = vld [vmem:[%s225 + $0xa0] sm:$0xff]
        %v376 = vld [vmem:[%s225 + $0xa8] sm:$0xff]
        %v377 = vld [vmem:[%s225 + $0xb0] sm:$0xff]
        %v378 = vld [vmem:[%s225 + $0xb8] sm:$0xff]
        %v379 = vld [vmem:[%s225 + $0xc0] sm:$0xff]
        %v380 = vld [vmem:[%s225 + $0xc8] sm:$0xff]
        %v381 = vld [vmem:[%s225 + $0xd0] sm:$0xff]
        %v382 = vld [vmem:[%s225 + $0xd8] sm:$0xff]
        %v383 = vld [vmem:[%s225 + $0xe0] sm:$0xff]
        %v384 = vld [vmem:[%s225 + $0xe8] sm:$0xff]
        %v385 = vld [vmem:[%s225 + $0xf0] sm:$0xff]
        %v386 = vld [vmem:[%s225 + $0xf8] sm:$0xff]
        %s387 = scalar_lea.vmem [#allocation2], 24
        %388 = vst.msk [vmem:[%s387 + $0x1] sm:$0xff] %vm245, %v355
        %389 = vst.msk [vmem:[%s387 + $0x9] sm:$0xff] %vm245, %v356
        %390 = vst.msk [vmem:[%s387 + $0x19] sm:$0xff] %vm245, %v357
        %391 = vst.msk [vmem:[%s387 + $0x21] sm:$0xff] %vm245, %v358
        %392 = vst.msk [vmem:[%s387 + $0x31] sm:$0xff] %vm245, %v359
        %393 = vst.msk [vmem:[%s387 + $0x39] sm:$0xff] %vm245, %v360
        %394 = vst.msk [vmem:[%s387 + $0x49] sm:$0xff] %vm245, %v361
        %395 = vst.msk [vmem:[%s387 + $0x51] sm:$0xff] %vm245, %v362
        %396 = vst.msk [vmem:[%s387 + $0x61] sm:$0xff] %vm245, %v363
        %397 = vst.msk [vmem:[%s387 + $0x69] sm:$0xff] %vm245, %v364
        %398 = vst.msk [vmem:[%s387 + $0x79] sm:$0xff] %vm245, %v365
        %399 = vst.msk [vmem:[%s387 + $0x81] sm:$0xff] %vm245, %v366
        %400 = vst.msk [vmem:[%s387 + $0x91] sm:$0xff] %vm245, %v367
        %401 = vst.msk [vmem:[%s387 + $0x99] sm:$0xff] %vm245, %v368
        %402 = vst.msk [vmem:[%s387 + $0xa9] sm:$0xff] %vm245, %v369
        %403 = vst.msk [vmem:[%s387 + $0xb1] sm:$0xff] %vm245, %v370
        %404 = vst.msk [vmem:[%s387 + $0xc1] sm:$0xff] %vm245, %v371
        %405 = vst.msk [vmem:[%s387 + $0xc9] sm:$0xff] %vm245, %v372
        %406 = vst.msk [vmem:[%s387 + $0xd9] sm:$0xff] %vm245, %v373
        %407 = vst.msk [vmem:[%s387 + $0xe1] sm:$0xff] %vm245, %v374
        %408 = vst.msk [vmem:[%s387 + $0xf1] sm:$0xff] %vm245, %v375
        %409 = vst.msk [vmem:[%s387 + $0xf9] sm:$0xff] %vm245, %v376
        %410 = vst.msk [vmem:[%s387 + $0x109] sm:$0xff] %vm245, %v377
        %411 = vst.msk [vmem:[%s387 + $0x111] sm:$0xff] %vm245, %v378
        %412 = vst.msk [vmem:[%s387 + $0x121] sm:$0xff] %vm245, %v379
        %413 = vst.msk [vmem:[%s387 + $0x129] sm:$0xff] %vm245, %v380
        %414 = vst.msk [vmem:[%s387 + $0x139] sm:$0xff] %vm245, %v381
        %415 = vst.msk [vmem:[%s387 + $0x141] sm:$0xff] %vm245, %v382
        %416 = vst.msk [vmem:[%s387 + $0x151] sm:$0xff] %vm245, %v383
        %417 = vst.msk [vmem:[%s387 + $0x159] sm:$0xff] %vm245, %v384
        %418 = vst.msk [vmem:[%s387 + $0x169] sm:$0xff] %vm245, %v385
        %419 = vst.msk [vmem:[%s387 + $0x171] sm:$0xff] %vm245, %v386
        %v420 = vld [vmem:[%s230] sm:$0xff]
        %v421 = vld [vmem:[%s230 + $0x8] sm:$0xff]
        %v422 = vld [vmem:[%s230 + $0x10] sm:$0xff]
        %v423 = vld [vmem:[%s230 + $0x18] sm:$0xff]
        %v424 = vld [vmem:[%s230 + $0x20] sm:$0xff]
        %v425 = vld [vmem:[%s230 + $0x28] sm:$0xff]
        %v426 = vld [vmem:[%s230 + $0x30] sm:$0xff]
        %v427 = vld [vmem:[%s230 + $0x38] sm:$0xff]
        %v428 = vld [vmem:[%s230 + $0x40] sm:$0xff]
        %v429 = vld [vmem:[%s230 + $0x48] sm:$0xff]
        %v430 = vld [vmem:[%s230 + $0x50] sm:$0xff]
        %v431 = vld [vmem:[%s230 + $0x58] sm:$0xff]
        %v432 = vld [vmem:[%s230 + $0x60] sm:$0xff]
        %v433 = vld [vmem:[%s230 + $0x68] sm:$0xff]
        %v434 = vld [vmem:[%s230 + $0x70] sm:$0xff]
        %v435 = vld [vmem:[%s230 + $0x78] sm:$0xff]
        %v436 = vld [vmem:[%s230 + $0x80] sm:$0xff]
        %v437 = vld [vmem:[%s230 + $0x88] sm:$0xff]
        %v438 = vld [vmem:[%s230 + $0x90] sm:$0xff]
        %v439 = vld [vmem:[%s230 + $0x98] sm:$0xff]
        %v440 = vld [vmem:[%s230 + $0xa0] sm:$0xff]
        %v441 = vld [vmem:[%s230 + $0xa8] sm:$0xff]
        %v442 = vld [vmem:[%s230 + $0xb0] sm:$0xff]
        %v443 = vld [vmem:[%s230 + $0xb8] sm:$0xff]
        %v444 = vld [vmem:[%s230 + $0xc0] sm:$0xff]
        %v445 = vld [vmem:[%s230 + $0xc8] sm:$0xff]
        %v446 = vld [vmem:[%s230 + $0xd0] sm:$0xff]
        %v447 = vld [vmem:[%s230 + $0xd8] sm:$0xff]
        %v448 = vld [vmem:[%s230 + $0xe0] sm:$0xff]
        %v449 = vld [vmem:[%s230 + $0xe8] sm:$0xff]
        %v450 = vld [vmem:[%s230 + $0xf0] sm:$0xff]
        %v451 = vld [vmem:[%s230 + $0xf8] sm:$0xff]
        %s452 = scalar_lea.vmem [#allocation3], 24
        %453 = vst.msk [vmem:[%s452 + $0x1] sm:$0xff] %vm245, %v420
        %454 = vst.msk [vmem:[%s452 + $0x9] sm:$0xff] %vm245, %v421
        %455 = vst.msk [vmem:[%s452 + $0x19] sm:$0xff] %vm245, %v422
        %456 = vst.msk [vmem:[%s452 + $0x21] sm:$0xff] %vm245, %v423
        %457 = vst.msk [vmem:[%s452 + $0x31] sm:$0xff] %vm245, %v424
        %458 = vst.msk [vmem:[%s452 + $0x39] sm:$0xff] %vm245, %v425
        %459 = vst.msk [vmem:[%s452 + $0x49] sm:$0xff] %vm245, %v426
        %460 = vst.msk [vmem:[%s452 + $0x51] sm:$0xff] %vm245, %v427
        %461 = vst.msk [vmem:[%s452 + $0x61] sm:$0xff] %vm245, %v428
        %462 = vst.msk [vmem:[%s452 + $0x69] sm:$0xff] %vm245, %v429
        %463 = vst.msk [vmem:[%s452 + $0x79] sm:$0xff] %vm245, %v430
        %464 = vst.msk [vmem:[%s452 + $0x81] sm:$0xff] %vm245, %v431
        %465 = vst.msk [vmem:[%s452 + $0x91] sm:$0xff] %vm245, %v432
        %466 = vst.msk [vmem:[%s452 + $0x99] sm:$0xff] %vm245, %v433
        %467 = vst.msk [vmem:[%s452 + $0xa9] sm:$0xff] %vm245, %v434
        %468 = vst.msk [vmem:[%s452 + $0xb1] sm:$0xff] %vm245, %v435
        %469 = vst.msk [vmem:[%s452 + $0xc1] sm:$0xff] %vm245, %v436
        %470 = vst.msk [vmem:[%s452 + $0xc9] sm:$0xff] %vm245, %v437
        %471 = vst.msk [vmem:[%s452 + $0xd9] sm:$0xff] %vm245, %v438
        %472 = vst.msk [vmem:[%s452 + $0xe1] sm:$0xff] %vm245, %v439
        %473 = vst.msk [vmem:[%s452 + $0xf1] sm:$0xff] %vm245, %v440
        %474 = vst.msk [vmem:[%s452 + $0xf9] sm:$0xff] %vm245, %v441
        %475 = vst.msk [vmem:[%s452 + $0x109] sm:$0xff] %vm245, %v442
        %476 = vst.msk [vmem:[%s452 + $0x111] sm:$0xff] %vm245, %v443
        %477 = vst.msk [vmem:[%s452 + $0x121] sm:$0xff] %vm245, %v444
        %478 = vst.msk [vmem:[%s452 + $0x129] sm:$0xff] %vm245, %v445
        %479 = vst.msk [vmem:[%s452 + $0x139] sm:$0xff] %vm245, %v446
        %480 = vst.msk [vmem:[%s452 + $0x141] sm:$0xff] %vm245, %v447
        %481 = vst.msk [vmem:[%s452 + $0x151] sm:$0xff] %vm245, %v448
        %482 = vst.msk [vmem:[%s452 + $0x159] sm:$0xff] %vm245, %v449
        %483 = vst.msk [vmem:[%s452 + $0x169] sm:$0xff] %vm245, %v450
        %484 = vst.msk [vmem:[%s452 + $0x171] sm:$0xff] %vm245, %v451
      $region40: #{tpu_custom_call.1} parent=35 // pred_fallthru
        _
      %s485 = smul.u32 %s20, 8
      %s486 = smul.u32 %s485, 24
      %s487 = scalar_lea.vmem [#allocation2], %s486
      %v488 = vld [vmem:[%s487] sm:$0xff]
      %v489 = vld [vmem:[%s487 + $0x8] sm:$0xff]
      %v490 = vld [vmem:[%s487 + $0x10] sm:$0x3]
      %v491 = vld [vmem:[%s487 + $0x18] sm:$0xff]
      %v492 = vld [vmem:[%s487 + $0x20] sm:$0xff]
      %v493 = vld [vmem:[%s487 + $0x28] sm:$0x3]
      %v494 = vld [vmem:[%s487 + $0x30] sm:$0xff]
      %v495 = vld [vmem:[%s487 + $0x38] sm:$0xff]
      %v496 = vld [vmem:[%s487 + $0x40] sm:$0x3]
      %v497 = vld [vmem:[%s487 + $0x48] sm:$0xff]
      %v498 = vld [vmem:[%s487 + $0x50] sm:$0xff]
      %v499 = vld [vmem:[%s487 + $0x58] sm:$0x3]
      %v500 = vld [vmem:[%s487 + $0x60] sm:$0xff]
      %v501 = vld [vmem:[%s487 + $0x68] sm:$0xff]
      %v502 = vld [vmem:[%s487 + $0x70] sm:$0x3]
      %v503 = vld [vmem:[%s487 + $0x78] sm:$0xff]
      %v504 = vld [vmem:[%s487 + $0x80] sm:$0xff]
      %v505 = vld [vmem:[%s487 + $0x88] sm:$0x3]
      %v506 = vld [vmem:[%s487 + $0x90] sm:$0xff]
      %v507 = vld [vmem:[%s487 + $0x98] sm:$0xff]
      %v508 = vld [vmem:[%s487 + $0xa0] sm:$0x3]
      %v509 = vld [vmem:[%s487 + $0xa8] sm:$0xff]
      %v510 = vld [vmem:[%s487 + $0xb0] sm:$0xff]
      %v511 = vld [vmem:[%s487 + $0xb8] sm:$0x3]
      %s512 = scalar_lea.vmem [#allocation3], %s486
      %v513 = vld [vmem:[%s512] sm:$0xff]
      %v514 = vld [vmem:[%s512 + $0x8] sm:$0xff]
      %v515 = vld [vmem:[%s512 + $0x10] sm:$0x3]
      %v516 = vld [vmem:[%s512 + $0x18] sm:$0xff]
      %v517 = vld [vmem:[%s512 + $0x20] sm:$0xff]
      %v518 = vld [vmem:[%s512 + $0x28] sm:$0x3]
      %v519 = vld [vmem:[%s512 + $0x30] sm:$0xff]
      %v520 = vld [vmem:[%s512 + $0x38] sm:$0xff]
      %v521 = vld [vmem:[%s512 + $0x40] sm:$0x3]
      %v522 = vld [vmem:[%s512 + $0x48] sm:$0xff]
      %v523 = vld [vmem:[%s512 + $0x50] sm:$0xff]
      %v524 = vld [vmem:[%s512 + $0x58] sm:$0x3]
      %v525 = vld [vmem:[%s512 + $0x60] sm:$0xff]
      %v526 = vld [vmem:[%s512 + $0x68] sm:$0xff]
      %v527 = vld [vmem:[%s512 + $0x70] sm:$0x3]
      %v528 = vld [vmem:[%s512 + $0x78] sm:$0xff]
      %v529 = vld [vmem:[%s512 + $0x80] sm:$0xff]
      %v530 = vld [vmem:[%s512 + $0x88] sm:$0x3]
      %v531 = vld [vmem:[%s512 + $0x90] sm:$0xff]
      %v532 = vld [vmem:[%s512 + $0x98] sm:$0xff]
      %v533 = vld [vmem:[%s512 + $0xa0] sm:$0x3]
      %v534 = vld [vmem:[%s512 + $0xa8] sm:$0xff]
      %v535 = vld [vmem:[%s512 + $0xb0] sm:$0xff]
      %v536 = vld [vmem:[%s512 + $0xb8] sm:$0x3]
      %vm537 = vcmask 31744
      %538 = vst.msk [vmem:[#allocation4] sm:$0xff] %vm537, %v488
      %539 = vst.msk [vmem:[#allocation4 + $0x8] sm:$0xff] %vm537, %v489
      %540 = vst.msk [vmem:[#allocation4 + $0x10] sm:$0xff] %vm537, %v491
      %541 = vst.msk [vmem:[#allocation4 + $0x18] sm:$0xff] %vm537, %v492
      %542 = vst.msk [vmem:[#allocation4 + $0x20] sm:$0xff] %vm537, %v494
      %543 = vst.msk [vmem:[#allocation4 + $0x28] sm:$0xff] %vm537, %v495
      %544 = vst.msk [vmem:[#allocation4 + $0x30] sm:$0xff] %vm537, %v497
      %545 = vst.msk [vmem:[#allocation4 + $0x38] sm:$0xff] %vm537, %v498
      %546 = vst.msk [vmem:[#allocation4 + $0x40] sm:$0xff] %vm537, %v500
      %547 = vst.msk [vmem:[#allocation4 + $0x48] sm:$0xff] %vm537, %v501
      %548 = vst.msk [vmem:[#allocation4 + $0x50] sm:$0xff] %vm537, %v503
      %549 = vst.msk [vmem:[#allocation4 + $0x58] sm:$0xff] %vm537, %v504
      %550 = vst.msk [vmem:[#allocation4 + $0x60] sm:$0xff] %vm537, %v506
      %551 = vst.msk [vmem:[#allocation4 + $0x68] sm:$0xff] %vm537, %v507
      %552 = vst.msk [vmem:[#allocation4 + $0x70] sm:$0xff] %vm537, %v509
      %553 = vst.msk [vmem:[#allocation4 + $0x78] sm:$0xff] %vm537, %v510
      %570 = vrot.lane.b32.xlu0 %v513, 4
      %v571 = vpop.permute.xlu0 %570
      %572 = vrot.lane.b32.xlu0 %v514, 4
      %v573 = vpop.permute.xlu0 %572
      %574 = vrot.lane.b32.xlu0 %v516, 4
      %v575 = vpop.permute.xlu0 %574
      %576 = vrot.lane.b32.xlu0 %v517, 4
      %v577 = vpop.permute.xlu0 %576
      %578 = vrot.lane.b32.xlu0 %v519, 4
      %v579 = vpop.permute.xlu0 %578
      %580 = vrot.lane.b32.xlu0 %v520, 4
      %v581 = vpop.permute.xlu0 %580
      %582 = vrot.lane.b32.xlu0 %v522, 4
      %v583 = vpop.permute.xlu0 %582
      %584 = vrot.lane.b32.xlu0 %v523, 4
      %v585 = vpop.permute.xlu0 %584
      %586 = vrot.lane.b32.xlu0 %v525, 4
      %v587 = vpop.permute.xlu0 %586
      %588 = vrot.lane.b32.xlu0 %v526, 4
      %v589 = vpop.permute.xlu0 %588
      %590 = vrot.lane.b32.xlu0 %v528, 4
      %v591 = vpop.permute.xlu0 %590
      %592 = vrot.lane.b32.xlu0 %v529, 4
      %v593 = vpop.permute.xlu0 %592
      %594 = vrot.lane.b32.xlu0 %v531, 4
      %v595 = vpop.permute.xlu0 %594
      %596 = vrot.lane.b32.xlu0 %v532, 4
      %v597 = vpop.permute.xlu0 %596
      %598 = vrot.lane.b32.xlu0 %v534, 4
      %v599 = vpop.permute.xlu0 %598
      %600 = vrot.lane.b32.xlu0 %v535, 4
      %v601 = vpop.permute.xlu0 %600
      %vm618 = vcmask 64544
      %619 = vst.msk [vmem:[#allocation4] sm:$0xff] %vm618, %v571
      %620 = vst.msk [vmem:[#allocation4 + $0x8] sm:$0xff] %vm618, %v573
      %621 = vst.msk [vmem:[#allocation4 + $0x10] sm:$0xff] %vm618, %v575
      %622 = vst.msk [vmem:[#allocation4 + $0x18] sm:$0xff] %vm618, %v577
      %623 = vst.msk [vmem:[#allocation4 + $0x20] sm:$0xff] %vm618, %v579
      %624 = vst.msk [vmem:[#allocation4 + $0x28] sm:$0xff] %vm618, %v581
      %625 = vst.msk [vmem:[#allocation4 + $0x30] sm:$0xff] %vm618, %v583
      %626 = vst.msk [vmem:[#allocation4 + $0x38] sm:$0xff] %vm618, %v585
      %627 = vst.msk [vmem:[#allocation4 + $0x40] sm:$0xff] %vm618, %v587
      %628 = vst.msk [vmem:[#allocation4 + $0x48] sm:$0xff] %vm618, %v589
      %629 = vst.msk [vmem:[#allocation4 + $0x50] sm:$0xff] %vm618, %v591
      %630 = vst.msk [vmem:[#allocation4 + $0x58] sm:$0xff] %vm618, %v593
      %631 = vst.msk [vmem:[#allocation4 + $0x60] sm:$0xff] %vm618, %v595
      %632 = vst.msk [vmem:[#allocation4 + $0x68] sm:$0xff] %vm618, %v597
      %633 = vst.msk [vmem:[#allocation4 + $0x70] sm:$0xff] %vm618, %v599
      %634 = vst.msk [vmem:[#allocation4 + $0x78] sm:$0xff] %vm618, %v601
      %vm659 = vcmask 1046528
      %v660 = vrot.slane %v488, 1
      %v661 = vrot.slane %v489, 1
      %v662 = vsel %vm659, %v660, %v661
      %v663 = vrot.slane %v490, 1
      %v664 = vsel %vm659, %v661, %v663
      %v665 = vrot.slane %v491, 1
      %v666 = vrot.slane %v492, 1
      %v667 = vsel %vm659, %v665, %v666
      %v668 = vrot.slane %v493, 1
      %v669 = vsel %vm659, %v666, %v668
      %v670 = vrot.slane %v494, 1
      %v671 = vrot.slane %v495, 1
      %v672 = vsel %vm659, %v670, %v671
      %v673 = vrot.slane %v496, 1
      %v674 = vsel %vm659, %v671, %v673
      %v675 = vrot.slane %v497, 1
      %v676 = vrot.slane %v498, 1
      %v677 = vsel %vm659, %v675, %v676
      %v678 = vrot.slane %v499, 1
      %v679 = vsel %vm659, %v676, %v678
      %v680 = vrot.slane %v500, 1
      %v681 = vrot.slane %v501, 1
      %v682 = vsel %vm659, %v680, %v681
      %v683 = vrot.slane %v502, 1
      %v684 = vsel %vm659, %v681, %v683
      %v685 = vrot.slane %v503, 1
      %v686 = vrot.slane %v504, 1
      %v687 = vsel %vm659, %v685, %v686
      %v688 = vrot.slane %v505, 1
      %v689 = vsel %vm659, %v686, %v688
      %v690 = vrot.slane %v506, 1
      %v691 = vrot.slane %v507, 1
      %v692 = vsel %vm659, %v690, %v691
      %v693 = vrot.slane %v508, 1
      %v694 = vsel %vm659, %v691, %v693
      %v695 = vrot.slane %v509, 1
      %v696 = vrot.slane %v510, 1
      %v697 = vsel %vm659, %v695, %v696
      %v698 = vrot.slane %v511, 1
      %v699 = vsel %vm659, %v696, %v698
      %700 = vrot.lane.b32.xlu0 %v662, 8
      %v701 = vpop.permute.xlu0 %700
      %702 = vrot.lane.b32.xlu0 %v664, 8
      %v703 = vpop.permute.xlu0 %702
      %704 = vrot.lane.b32.xlu0 %v667, 8
      %v705 = vpop.permute.xlu0 %704
      %706 = vrot.lane.b32.xlu0 %v669, 8
      %v707 = vpop.permute.xlu0 %706
      %708 = vrot.lane.b32.xlu0 %v672, 8
      %v709 = vpop.permute.xlu0 %708
      %710 = vrot.lane.b32.xlu0 %v674, 8
      %v711 = vpop.permute.xlu0 %710
      %712 = vrot.lane.b32.xlu0 %v677, 8
      %v713 = vpop.permute.xlu0 %712
      %714 = vrot.lane.b32.xlu0 %v679, 8
      %v715 = vpop.permute.xlu0 %714
      %716 = vrot.lane.b32.xlu0 %v682, 8
      %v717 = vpop.permute.xlu0 %716
      %718 = vrot.lane.b32.xlu0 %v684, 8
      %v719 = vpop.permute.xlu0 %718
      %720 = vrot.lane.b32.xlu0 %v687, 8
      %v721 = vpop.permute.xlu0 %720
      %722 = vrot.lane.b32.xlu0 %v689, 8
      %v723 = vpop.permute.xlu0 %722
      %724 = vrot.lane.b32.xlu0 %v692, 8
      %v725 = vpop.permute.xlu0 %724
      %726 = vrot.lane.b32.xlu0 %v694, 8
      %v727 = vpop.permute.xlu0 %726
      %728 = vrot.lane.b32.xlu0 %v697, 8
      %v729 = vpop.permute.xlu0 %728
      %730 = vrot.lane.b32.xlu0 %v699, 8
      %v731 = vpop.permute.xlu0 %730
      %vm748 = vcmask 97344
      %749 = vst.msk [vmem:[#allocation4] sm:$0xff] %vm748, %v701
      %750 = vst.msk [vmem:[#allocation4 + $0x8] sm:$0xff] %vm748, %v703
      %751 = vst.msk [vmem:[#allocation4 + $0x10] sm:$0xff] %vm748, %v705
      %752 = vst.msk [vmem:[#allocation4 + $0x18] sm:$0xff] %vm748, %v707
      %753 = vst.msk [vmem:[#allocation4 + $0x20] sm:$0xff] %vm748, %v709
      %754 = vst.msk [vmem:[#allocation4 + $0x28] sm:$0xff] %vm748, %v711
      %755 = vst.msk [vmem:[#allocation4 + $0x30] sm:$0xff] %vm748, %v713
      %756 = vst.msk [vmem:[#allocation4 + $0x38] sm:$0xff] %vm748, %v715
      %757 = vst.msk [vmem:[#allocation4 + $0x40] sm:$0xff] %vm748, %v717
      %758 = vst.msk [vmem:[#allocation4 + $0x48] sm:$0xff] %vm748, %v719
      %759 = vst.msk [vmem:[#allocation4 + $0x50] sm:$0xff] %vm748, %v721
      %760 = vst.msk [vmem:[#allocation4 + $0x58] sm:$0xff] %vm748, %v723
      %761 = vst.msk [vmem:[#allocation4 + $0x60] sm:$0xff] %vm748, %v725
      %762 = vst.msk [vmem:[#allocation4 + $0x68] sm:$0xff] %vm748, %v727
      %763 = vst.msk [vmem:[#allocation4 + $0x70] sm:$0xff] %vm748, %v729
      %764 = vst.msk [vmem:[#allocation4 + $0x78] sm:$0xff] %vm748, %v731
      %v773 = vrot.slane %v513, 1
      %v774 = vrot.slane %v514, 1
      %v775 = vsel %vm659, %v773, %v774
      %v776 = vrot.slane %v515, 1
      %v777 = vsel %vm659, %v774, %v776
      %v778 = vrot.slane %v516, 1
      %v779 = vrot.slane %v517, 1
      %v780 = vsel %vm659, %v778, %v779
      %v781 = vrot.slane %v518, 1
      %v782 = vsel %vm659, %v779, %v781
      %v783 = vrot.slane %v519, 1
      %v784 = vrot.slane %v520, 1
      %v785 = vsel %vm659, %v783, %v784
      %v786 = vrot.slane %v521, 1
      %v787 = vsel %vm659, %v784, %v786
      %v788 = vrot.slane %v522, 1
      %v789 = vrot.slane %v523, 1
      %v790 = vsel %vm659, %v788, %v789
      %v791 = vrot.slane %v524, 1
      %v792 = vsel %vm659, %v789, %v791
      %v793 = vrot.slane %v525, 1
      %v794 = vrot.slane %v526, 1
      %v795 = vsel %vm659, %v793, %v794
      %v796 = vrot.slane %v527, 1
      %v797 = vsel %vm659, %v794, %v796
      %v798 = vrot.slane %v528, 1
      %v799 = vrot.slane %v529, 1
      %v800 = vsel %vm659, %v798, %v799
      %v801 = vrot.slane %v530, 1
      %v802 = vsel %vm659, %v799, %v801
      %v803 = vrot.slane %v531, 1
      %v804 = vrot.slane %v532, 1
      %v805 = vsel %vm659, %v803, %v804
      %v806 = vrot.slane %v533, 1
      %v807 = vsel %vm659, %v804, %v806
      %v808 = vrot.slane %v534, 1
      %v809 = vrot.slane %v535, 1
      %v810 = vsel %vm659, %v808, %v809
      %v811 = vrot.slane %v536, 1
      %v812 = vsel %vm659, %v809, %v811
      %813 = vrot.lane.b32.xlu0 %v775, 12
      %v814 = vpop.permute.xlu0 %813
      %815 = vrot.lane.b32.xlu0 %v777, 12
      %v816 = vpop.permute.xlu0 %815
      %817 = vrot.lane.b32.xlu0 %v780, 12
      %v818 = vpop.permute.xlu0 %817
      %819 = vrot.lane.b32.xlu0 %v782, 12
      %v820 = vpop.permute.xlu0 %819
      %821 = vrot.lane.b32.xlu0 %v785, 12
      %v822 = vpop.permute.xlu0 %821
      %823 = vrot.lane.b32.xlu0 %v787, 12
      %v824 = vpop.permute.xlu0 %823
      %825 = vrot.lane.b32.xlu0 %v790, 12
      %v826 = vpop.permute.xlu0 %825
      %827 = vrot.lane.b32.xlu0 %v792, 12
      %v828 = vpop.permute.xlu0 %827
      %829 = vrot.lane.b32.xlu0 %v795, 12
      %v830 = vpop.permute.xlu0 %829
      %831 = vrot.lane.b32.xlu0 %v797, 12
      %v832 = vpop.permute.xlu0 %831
      %833 = vrot.lane.b32.xlu0 %v800, 12
      %v834 = vpop.permute.xlu0 %833
      %835 = vrot.lane.b32.xlu0 %v802, 12
      %v836 = vpop.permute.xlu0 %835
      %837 = vrot.lane.b32.xlu0 %v805, 12
      %v838 = vpop.permute.xlu0 %837
      %839 = vrot.lane.b32.xlu0 %v807, 12
      %v840 = vpop.permute.xlu0 %839
      %841 = vrot.lane.b32.xlu0 %v810, 12
      %v842 = vpop.permute.xlu0 %841
      %843 = vrot.lane.b32.xlu0 %v812, 12
      %v844 = vpop.permute.xlu0 %843
      %vm861 = vcmask 130144
      %862 = vst.msk [vmem:[#allocation4] sm:$0xff] %vm861, %v814
      %863 = vst.msk [vmem:[#allocation4 + $0x8] sm:$0xff] %vm861, %v816
      %864 = vst.msk [vmem:[#allocation4 + $0x10] sm:$0xff] %vm861, %v818
      %865 = vst.msk [vmem:[#allocation4 + $0x18] sm:$0xff] %vm861, %v820
      %866 = vst.msk [vmem:[#allocation4 + $0x20] sm:$0xff] %vm861, %v822
      %867 = vst.msk [vmem:[#allocation4 + $0x28] sm:$0xff] %vm861, %v824
      %868 = vst.msk [vmem:[#allocation4 + $0x30] sm:$0xff] %vm861, %v826
      %869 = vst.msk [vmem:[#allocation4 + $0x38] sm:$0xff] %vm861, %v828
      %870 = vst.msk [vmem:[#allocation4 + $0x40] sm:$0xff] %vm861, %v830
      %871 = vst.msk [vmem:[#allocation4 + $0x48] sm:$0xff] %vm861, %v832
      %872 = vst.msk [vmem:[#allocation4 + $0x50] sm:$0xff] %vm861, %v834
      %873 = vst.msk [vmem:[#allocation4 + $0x58] sm:$0xff] %vm861, %v836
      %874 = vst.msk [vmem:[#allocation4 + $0x60] sm:$0xff] %vm861, %v838
      %875 = vst.msk [vmem:[#allocation4 + $0x68] sm:$0xff] %vm861, %v840
      %876 = vst.msk [vmem:[#allocation4 + $0x70] sm:$0xff] %vm861, %v842
      %877 = vst.msk [vmem:[#allocation4 + $0x78] sm:$0xff] %vm861, %v844
      %vm878 = vcmask 1045504
      %v879 = vrot.slane %v488, 2
      %v880 = vrot.slane %v489, 2
      %v881 = vsel %vm878, %v879, %v880
      %v882 = vrot.slane %v490, 2
      %v883 = vsel %vm878, %v880, %v882
      %v884 = vrot.slane %v491, 2
      %v885 = vrot.slane %v492, 2
      %v886 = vsel %vm878, %v884, %v885
      %v887 = vrot.slane %v493, 2
      %v888 = vsel %vm878, %v885, %v887
      %v889 = vrot.slane %v494, 2
      %v890 = vrot.slane %v495, 2
      %v891 = vsel %vm878, %v889, %v890
      %v892 = vrot.slane %v496, 2
      %v893 = vsel %vm878, %v890, %v892
      %v894 = vrot.slane %v497, 2
      %v895 = vrot.slane %v498, 2
      %v896 = vsel %vm878, %v894, %v895
      %v897 = vrot.slane %v499, 2
      %v898 = vsel %vm878, %v895, %v897
      %v899 = vrot.slane %v500, 2
      %v900 = vrot.slane %v501, 2
      %v901 = vsel %vm878, %v899, %v900
      %v902 = vrot.slane %v502, 2
      %v903 = vsel %vm878, %v900, %v902
      %v904 = vrot.slane %v503, 2
      %v905 = vrot.slane %v504, 2
      %v906 = vsel %vm878, %v904, %v905
      %v907 = vrot.slane %v505, 2
      %v908 = vsel %vm878, %v905, %v907
      %v909 = vrot.slane %v506, 2
      %v910 = vrot.slane %v507, 2
      %v911 = vsel %vm878, %v909, %v910
      %v912 = vrot.slane %v508, 2
      %v913 = vsel %vm878, %v910, %v912
      %v914 = vrot.slane %v509, 2
      %v915 = vrot.slane %v510, 2
      %v916 = vsel %vm878, %v914, %v915
      %v917 = vrot.slane %v511, 2
      %v918 = vsel %vm878, %v915, %v917
      %919 = vrot.lane.b32.xlu0 %v881, 16
      %v920 = vpop.permute.xlu0 %919
      %921 = vrot.lane.b32.xlu0 %v883, 16
      %v922 = vpop.permute.xlu0 %921
      %923 = vrot.lane.b32.xlu0 %v886, 16
      %v924 = vpop.permute.xlu0 %923
      %925 = vrot.lane.b32.xlu0 %v888, 16
      %v926 = vpop.permute.xlu0 %925
      %927 = vrot.lane.b32.xlu0 %v891, 16
      %v928 = vpop.permute.xlu0 %927
      %929 = vrot.lane.b32.xlu0 %v893, 16
      %v930 = vpop.permute.xlu0 %929
      %931 = vrot.lane.b32.xlu0 %v896, 16
      %v932 = vpop.permute.xlu0 %931
      %933 = vrot.lane.b32.xlu0 %v898, 16
      %v934 = vpop.permute.xlu0 %933
      %935 = vrot.lane.b32.xlu0 %v901, 16
      %v936 = vpop.permute.xlu0 %935
      %937 = vrot.lane.b32.xlu0 %v903, 16
      %v938 = vpop.permute.xlu0 %937
      %939 = vrot.lane.b32.xlu0 %v906, 16
      %v940 = vpop.permute.xlu0 %939
      %941 = vrot.lane.b32.xlu0 %v908, 16
      %v942 = vpop.permute.xlu0 %941
      %943 = vrot.lane.b32.xlu0 %v911, 16
      %v944 = vpop.permute.xlu0 %943
      %945 = vrot.lane.b32.xlu0 %v913, 16
      %v946 = vpop.permute.xlu0 %945
      %947 = vrot.lane.b32.xlu0 %v916, 16
      %v948 = vpop.permute.xlu0 %947
      %949 = vrot.lane.b32.xlu0 %v918, 16
      %v950 = vpop.permute.xlu0 %949
      %vm967 = vcmask 162944
      %968 = vst.msk [vmem:[#allocation4] sm:$0xff] %vm967, %v920
      %969 = vst.msk [vmem:[#allocation4 + $0x8] sm:$0xff] %vm967, %v922
      %970 = vst.msk [vmem:[#allocation4 + $0x10] sm:$0xff] %vm967, %v924
      %971 = vst.msk [vmem:[#allocation4 + $0x18] sm:$0xff] %vm967, %v926
      %972 = vst.msk [vmem:[#allocation4 + $0x20] sm:$0xff] %vm967, %v928
      %973 = vst.msk [vmem:[#allocation4 + $0x28] sm:$0xff] %vm967, %v930
      %974 = vst.msk [vmem:[#allocation4 + $0x30] sm:$0xff] %vm967, %v932
      %975 = vst.msk [vmem:[#allocation4 + $0x38] sm:$0xff] %vm967, %v934
      %976 = vst.msk [vmem:[#allocation4 + $0x40] sm:$0xff] %vm967, %v936
      %977 = vst.msk [vmem:[#allocation4 + $0x48] sm:$0xff] %vm967, %v938
      %978 = vst.msk [vmem:[#allocation4 + $0x50] sm:$0xff] %vm967, %v940
      %979 = vst.msk [vmem:[#allocation4 + $0x58] sm:$0xff] %vm967, %v942
      %980 = vst.msk [vmem:[#allocation4 + $0x60] sm:$0xff] %vm967, %v944
      %981 = vst.msk [vmem:[#allocation4 + $0x68] sm:$0xff] %vm967, %v946
      %982 = vst.msk [vmem:[#allocation4 + $0x70] sm:$0xff] %vm967, %v948
      %983 = vst.msk [vmem:[#allocation4 + $0x78] sm:$0xff] %vm967, %v950
      %v984 = vrot.slane %v513, 2
      %v985 = vrot.slane %v514, 2
      %v986 = vsel %vm878, %v984, %v985
      %v987 = vrot.slane %v515, 2
      %v988 = vsel %vm878, %v985, %v987
      %v989 = vrot.slane %v516, 2
      %v990 = vrot.slane %v517, 2
      %v991 = vsel %vm878, %v989, %v990
      %v992 = vrot.slane %v518, 2
      %v993 = vsel %vm878, %v990, %v992
      %v994 = vrot.slane %v519, 2
      %v995 = vrot.slane %v520, 2
      %v996 = vsel %vm878, %v994, %v995
      %v997 = vrot.slane %v521, 2
      %v998 = vsel %vm878, %v995, %v997
      %v999 = vrot.slane %v522, 2
      %v1000 = vrot.slane %v523, 2
      %v1001 = vsel %vm878, %v999, %v1000
      %v1002 = vrot.slane %v524, 2
      %v1003 = vsel %vm878, %v1000, %v1002
      %v1004 = vrot.slane %v525, 2
      %v1005 = vrot.slane %v526, 2
      %v1006 = vsel %vm878, %v1004, %v1005
      %v1007 = vrot.slane %v527, 2
      %v1008 = vsel %vm878, %v1005, %v1007
      %v1009 = vrot.slane %v528, 2
      %v1010 = vrot.slane %v529, 2
      %v1011 = vsel %vm878, %v1009, %v1010
      %v1012 = vrot.slane %v530, 2
      %v1013 = vsel %vm878, %v1010, %v1012
      %v1014 = vrot.slane %v531, 2
      %v1015 = vrot.slane %v532, 2
      %v1016 = vsel %vm878, %v1014, %v1015
      %v1017 = vrot.slane %v533, 2
      %v1018 = vsel %vm878, %v1015, %v1017
      %v1019 = vrot.slane %v534, 2
      %v1020 = vrot.slane %v535, 2
      %v1021 = vsel %vm878, %v1019, %v1020
      %v1022 = vrot.slane %v536, 2
      %v1023 = vsel %vm878, %v1020, %v1022
      %1024 = vrot.lane.b32.xlu0 %v986, 20
      %v1025 = vpop.permute.xlu0 %1024
      %1026 = vrot.lane.b32.xlu0 %v988, 20
      %v1027 = vpop.permute.xlu0 %1026
      %1028 = vrot.lane.b32.xlu0 %v991, 20
      %v1029 = vpop.permute.xlu0 %1028
      %1030 = vrot.lane.b32.xlu0 %v993, 20
      %v1031 = vpop.permute.xlu0 %1030
      %1032 = vrot.lane.b32.xlu0 %v996, 20
      %v1033 = vpop.permute.xlu0 %1032
      %1034 = vrot.lane.b32.xlu0 %v998, 20
      %v1035 = vpop.permute.xlu0 %1034
      %1036 = vrot.lane.b32.xlu0 %v1001, 20
      %v1037 = vpop.permute.xlu0 %1036
      %1038 = vrot.lane.b32.xlu0 %v1003, 20
      %v1039 = vpop.permute.xlu0 %1038
      %1040 = vrot.lane.b32.xlu0 %v1006, 20
      %v1041 = vpop.permute.xlu0 %1040
      %1042 = vrot.lane.b32.xlu0 %v1008, 20
      %v1043 = vpop.permute.xlu0 %1042
      %1044 = vrot.lane.b32.xlu0 %v1011, 20
      %v1045 = vpop.permute.xlu0 %1044
      %1046 = vrot.lane.b32.xlu0 %v1013, 20
      %v1047 = vpop.permute.xlu0 %1046
      %1048 = vrot.lane.b32.xlu0 %v1016, 20
      %v1049 = vpop.permute.xlu0 %1048
      %1050 = vrot.lane.b32.xlu0 %v1018, 20
      %v1051 = vpop.permute.xlu0 %1050
      %1052 = vrot.lane.b32.xlu0 %v1021, 20
      %v1053 = vpop.permute.xlu0 %1052
      %1054 = vrot.lane.b32.xlu0 %v1023, 20
      %v1055 = vpop.permute.xlu0 %1054
      %vm1072 = vcmask 195744
      %1073 = vst.msk [vmem:[#allocation4] sm:$0xff] %vm1072, %v1025
      %1074 = vst.msk [vmem:[#allocation4 + $0x8] sm:$0xff] %vm1072, %v1027
      %1075 = vst.msk [vmem:[#allocation4 + $0x10] sm:$0xff] %vm1072, %v1029
      %1076 = vst.msk [vmem:[#allocation4 + $0x18] sm:$0xff] %vm1072, %v1031
      %1077 = vst.msk [vmem:[#allocation4 + $0x20] sm:$0xff] %vm1072, %v1033
      %1078 = vst.msk [vmem:[#allocation4 + $0x28] sm:$0xff] %vm1072, %v1035
      %1079 = vst.msk [vmem:[#allocation4 + $0x30] sm:$0xff] %vm1072, %v1037
      %1080 = vst.msk [vmem:[#allocation4 + $0x38] sm:$0xff] %vm1072, %v1039
      %1081 = vst.msk [vmem:[#allocation4 + $0x40] sm:$0xff] %vm1072, %v1041
      %1082 = vst.msk [vmem:[#allocation4 + $0x48] sm:$0xff] %vm1072, %v1043
      %1083 = vst.msk [vmem:[#allocation4 + $0x50] sm:$0xff] %vm1072, %v1045
      %1084 = vst.msk [vmem:[#allocation4 + $0x58] sm:$0xff] %vm1072, %v1047
      %1085 = vst.msk [vmem:[#allocation4 + $0x60] sm:$0xff] %vm1072, %v1049
      %1086 = vst.msk [vmem:[#allocation4 + $0x68] sm:$0xff] %vm1072, %v1051
      %1087 = vst.msk [vmem:[#allocation4 + $0x70] sm:$0xff] %vm1072, %v1053
      %1088 = vst.msk [vmem:[#allocation4 + $0x78] sm:$0xff] %vm1072, %v1055
      %s1089 = sadd.s32 %s485, 1
      %s1090 = smul.u32 %s1089, 24
      %s1091 = scalar_lea.vmem [#allocation2], %s1090
      %v1092 = vld [vmem:[%s1091] sm:$0xff]
      %v1093 = vld [vmem:[%s1091 + $0x8] sm:$0xff]
      %v1094 = vld [vmem:[%s1091 + $0x10] sm:$0x3]
      %v1095 = vld [vmem:[%s1091 + $0x18] sm:$0xff]
      %v1096 = vld [vmem:[%s1091 + $0x20] sm:$0xff]
      %v1097 = vld [vmem:[%s1091 + $0x28] sm:$0x3]
      %v1098 = vld [vmem:[%s1091 + $0x30] sm:$0xff]
      %v1099 = vld [vmem:[%s1091 + $0x38] sm:$0xff]
      %v1100 = vld [vmem:[%s1091 + $0x40] sm:$0x3]
      %v1101 = vld [vmem:[%s1091 + $0x48] sm:$0xff]
      %v1102 = vld [vmem:[%s1091 + $0x50] sm:$0xff]
      %v1103 = vld [vmem:[%s1091 + $0x58] sm:$0x3]
      %v1104 = vld [vmem:[%s1091 + $0x60] sm:$0xff]
      %v1105 = vld [vmem:[%s1091 + $0x68] sm:$0xff]
      %v1106 = vld [vmem:[%s1091 + $0x70] sm:$0x3]
      %v1107 = vld [vmem:[%s1091 + $0x78] sm:$0xff]
      %v1108 = vld [vmem:[%s1091 + $0x80] sm:$0xff]
      %v1109 = vld [vmem:[%s1091 + $0x88] sm:$0x3]
      %v1110 = vld [vmem:[%s1091 + $0x90] sm:$0xff]
      %v1111 = vld [vmem:[%s1091 + $0x98] sm:$0xff]
      %v1112 = vld [vmem:[%s1091 + $0xa0] sm:$0x3]
      %v1113 = vld [vmem:[%s1091 + $0xa8] sm:$0xff]
      %v1114 = vld [vmem:[%s1091 + $0xb0] sm:$0xff]
      %v1115 = vld [vmem:[%s1091 + $0xb8] sm:$0x3]
      %s1116 = scalar_lea.vmem [#allocation3], %s1090
      %v1117 = vld [vmem:[%s1116] sm:$0xff]
      %v1118 = vld [vmem:[%s1116 + $0x8] sm:$0xff]
      %v1119 = vld [vmem:[%s1116 + $0x10] sm:$0x3]
      %v1120 = vld [vmem:[%s1116 + $0x18] sm:$0xff]
      %v1121 = vld [vmem:[%s1116 + $0x20] sm:$0xff]
      %v1122 = vld [vmem:[%s1116 + $0x28] sm:$0x3]
      %v1123 = vld [vmem:[%s1116 + $0x30] sm:$0xff]
      %v1124 = vld [vmem:[%s1116 + $0x38] sm:$0xff]
      %v1125 = vld [vmem:[%s1116 + $0x40] sm:$0x3]
      %v1126 = vld [vmem:[%s1116 + $0x48] sm:$0xff]
      %v1127 = vld [vmem:[%s1116 + $0x50] sm:$0xff]
      %v1128 = vld [vmem:[%s1116 + $0x58] sm:$0x3]
      %v1129 = vld [vmem:[%s1116 + $0x60] sm:$0xff]
      %v1130 = vld [vmem:[%s1116 + $0x68] sm:$0xff]
      %v1131 = vld [vmem:[%s1116 + $0x70] sm:$0x3]
      %v1132 = vld [vmem:[%s1116 + $0x78] sm:$0xff]
      %v1133 = vld [vmem:[%s1116 + $0x80] sm:$0xff]
      %v1134 = vld [vmem:[%s1116 + $0x88] sm:$0x3]
      %v1135 = vld [vmem:[%s1116 + $0x90] sm:$0xff]
      %v1136 = vld [vmem:[%s1116 + $0x98] sm:$0xff]
      %v1137 = vld [vmem:[%s1116 + $0xa0] sm:$0x3]
      %v1138 = vld [vmem:[%s1116 + $0xa8] sm:$0xff]
      %v1139 = vld [vmem:[%s1116 + $0xb0] sm:$0xff]
      %v1140 = vld [vmem:[%s1116 + $0xb8] sm:$0x3]
      %1157 = vrot.lane.b32.xlu0 %v1092, 24
      %v1158 = vpop.permute.xlu0 %1157
      %1159 = vrot.lane.b32.xlu0 %v1093, 24
      %v1160 = vpop.permute.xlu0 %1159
      %1161 = vrot.lane.b32.xlu0 %v1095, 24
      %v1162 = vpop.permute.xlu0 %1161
      %1163 = vrot.lane.b32.xlu0 %v1096, 24
      %v1164 = vpop.permute.xlu0 %1163
      %1165 = vrot.lane.b32.xlu0 %v1098, 24
      %v1166 = vpop.permute.xlu0 %1165
      %1167 = vrot.lane.b32.xlu0 %v1099, 24
      %v1168 = vpop.permute.xlu0 %1167
      %1169 = vrot.lane.b32.xlu0 %v1101, 24
      %v1170 = vpop.permute.xlu0 %1169
      %1171 = vrot.lane.b32.xlu0 %v1102, 24
      %v1172 = vpop.permute.xlu0 %1171
      %1173 = vrot.lane.b32.xlu0 %v1104, 24
      %v1174 = vpop.permute.xlu0 %1173
      %1175 = vrot.lane.b32.xlu0 %v1105, 24
      %v1176 = vpop.permute.xlu0 %1175
      %1177 = vrot.lane.b32.xlu0 %v1107, 24
      %v1178 = vpop.permute.xlu0 %1177
      %1179 = vrot.lane.b32.xlu0 %v1108, 24
      %v1180 = vpop.permute.xlu0 %1179
      %1181 = vrot.lane.b32.xlu0 %v1110, 24
      %v1182 = vpop.permute.xlu0 %1181
      %1183 = vrot.lane.b32.xlu0 %v1111, 24
      %v1184 = vpop.permute.xlu0 %1183
      %1185 = vrot.lane.b32.xlu0 %v1113, 24
      %v1186 = vpop.permute.xlu0 %1185
      %1187 = vrot.lane.b32.xlu0 %v1114, 24
      %v1188 = vpop.permute.xlu0 %1187
      %vm1205 = vcmask 228544
      %1206 = vst.msk [vmem:[#allocation4] sm:$0xff] %vm1205, %v1158
      %1207 = vst.msk [vmem:[#allocation4 + $0x8] sm:$0xff] %vm1205, %v1160
      %1208 = vst.msk [vmem:[#allocation4 + $0x10] sm:$0xff] %vm1205, %v1162
      %1209 = vst.msk [vmem:[#allocation4 + $0x18] sm:$0xff] %vm1205, %v1164
      %1210 = vst.msk [vmem:[#allocation4 + $0x20] sm:$0xff] %vm1205, %v1166
      %1211 = vst.msk [vmem:[#allocation4 + $0x28] sm:$0xff] %vm1205, %v1168
      %1212 = vst.msk [vmem:[#allocation4 + $0x30] sm:$0xff] %vm1205, %v1170
      %1213 = vst.msk [vmem:[#allocation4 + $0x38] sm:$0xff] %vm1205, %v1172
      %1214 = vst.msk [vmem:[#allocation4 + $0x40] sm:$0xff] %vm1205, %v1174
      %1215 = vst.msk [vmem:[#allocation4 + $0x48] sm:$0xff] %vm1205, %v1176
      %1216 = vst.msk [vmem:[#allocation4 + $0x50] sm:$0xff] %vm1205, %v1178
      %1217 = vst.msk [vmem:[#allocation4 + $0x58] sm:$0xff] %vm1205, %v1180
      %1218 = vst.msk [vmem:[#allocation4 + $0x60] sm:$0xff] %vm1205, %v1182
      %1219 = vst.msk [vmem:[#allocation4 + $0x68] sm:$0xff] %vm1205, %v1184
      %1220 = vst.msk [vmem:[#allocation4 + $0x70] sm:$0xff] %vm1205, %v1186
      %1221 = vst.msk [vmem:[#allocation4 + $0x78] sm:$0xff] %vm1205, %v1188
      %1238 = vrot.lane.b32.xlu0 %v1117, 28
      %v1239 = vpop.permute.xlu0 %1238
      %1240 = vrot.lane.b32.xlu0 %v1118, 28
      %v1241 = vpop.permute.xlu0 %1240
      %1242 = vrot.lane.b32.xlu0 %v1120, 28
      %v1243 = vpop.permute.xlu0 %1242
      %1244 = vrot.lane.b32.xlu0 %v1121, 28
      %v1245 = vpop.permute.xlu0 %1244
      %1246 = vrot.lane.b32.xlu0 %v1123, 28
      %v1247 = vpop.permute.xlu0 %1246
      %1248 = vrot.lane.b32.xlu0 %v1124, 28
      %v1249 = vpop.permute.xlu0 %1248
      %1250 = vrot.lane.b32.xlu0 %v1126, 28
      %v1251 = vpop.permute.xlu0 %1250
      %1252 = vrot.lane.b32.xlu0 %v1127, 28
      %v1253 = vpop.permute.xlu0 %1252
      %1254 = vrot.lane.b32.xlu0 %v1129, 28
      %v1255 = vpop.permute.xlu0 %1254
      %1256 = vrot.lane.b32.xlu0 %v1130, 28
      %v1257 = vpop.permute.xlu0 %1256
      %1258 = vrot.lane.b32.xlu0 %v1132, 28
      %v1259 = vpop.permute.xlu0 %1258
      %1260 = vrot.lane.b32.xlu0 %v1133, 28
      %v1261 = vpop.permute.xlu0 %1260
      %1262 = vrot.lane.b32.xlu0 %v1135, 28
      %v1263 = vpop.permute.xlu0 %1262
      %1264 = vrot.lane.b32.xlu0 %v1136, 28
      %v1265 = vpop.permute.xlu0 %1264
      %1266 = vrot.lane.b32.xlu0 %v1138, 28
      %v1267 = vpop.permute.xlu0 %1266
      %1268 = vrot.lane.b32.xlu0 %v1139, 28
      %v1269 = vpop.permute.xlu0 %1268
      %vm1286 = vcmask 261344
      %1287 = vst.msk [vmem:[#allocation4] sm:$0xff] %vm1286, %v1239
      %1288 = vst.msk [vmem:[#allocation4 + $0x8] sm:$0xff] %vm1286, %v1241
      %1289 = vst.msk [vmem:[#allocation4 + $0x10] sm:$0xff] %vm1286, %v1243
      %1290 = vst.msk [vmem:[#allocation4 + $0x18] sm:$0xff] %vm1286, %v1245
      %1291 = vst.msk [vmem:[#allocation4 + $0x20] sm:$0xff] %vm1286, %v1247
      %1292 = vst.msk [vmem:[#allocation4 + $0x28] sm:$0xff] %vm1286, %v1249
      %1293 = vst.msk [vmem:[#allocation4 + $0x30] sm:$0xff] %vm1286, %v1251
      %1294 = vst.msk [vmem:[#allocation4 + $0x38] sm:$0xff] %vm1286, %v1253
      %1295 = vst.msk [vmem:[#allocation4 + $0x40] sm:$0xff] %vm1286, %v1255
      %1296 = vst.msk [vmem:[#allocation4 + $0x48] sm:$0xff] %vm1286, %v1257
      %1297 = vst.msk [vmem:[#allocation4 + $0x50] sm:$0xff] %vm1286, %v1259
      %1298 = vst.msk [vmem:[#allocation4 + $0x58] sm:$0xff] %vm1286, %v1261
      %1299 = vst.msk [vmem:[#allocation4 + $0x60] sm:$0xff] %vm1286, %v1263
      %1300 = vst.msk [vmem:[#allocation4 + $0x68] sm:$0xff] %vm1286, %v1265
      %1301 = vst.msk [vmem:[#allocation4 + $0x70] sm:$0xff] %vm1286, %v1267
      %1302 = vst.msk [vmem:[#allocation4 + $0x78] sm:$0xff] %vm1286, %v1269
      %v1311 = vrot.slane %v1092, 1
      %v1312 = vrot.slane %v1093, 1
      %v1313 = vsel %vm659, %v1311, %v1312
      %v1314 = vrot.slane %v1094, 1
      %v1315 = vsel %vm659, %v1312, %v1314
      %v1316 = vrot.slane %v1095, 1
      %v1317 = vrot.slane %v1096, 1
      %v1318 = vsel %vm659, %v1316, %v1317
      %v1319 = vrot.slane %v1097, 1
      %v1320 = vsel %vm659, %v1317, %v1319
      %v1321 = vrot.slane %v1098, 1
      %v1322 = vrot.slane %v1099, 1
      %v1323 = vsel %vm659, %v1321, %v1322
      %v1324 = vrot.slane %v1100, 1
      %v1325 = vsel %vm659, %v1322, %v1324
      %v1326 = vrot.slane %v1101, 1
      %v1327 = vrot.slane %v1102, 1
      %v1328 = vsel %vm659, %v1326, %v1327
      %v1329 = vrot.slane %v1103, 1
      %v1330 = vsel %vm659, %v1327, %v1329
      %v1331 = vrot.slane %v1104, 1
      %v1332 = vrot.slane %v1105, 1
      %v1333 = vsel %vm659, %v1331, %v1332
      %v1334 = vrot.slane %v1106, 1
      %v1335 = vsel %vm659, %v1332, %v1334
      %v1336 = vrot.slane %v1107, 1
      %v1337 = vrot.slane %v1108, 1
      %v1338 = vsel %vm659, %v1336, %v1337
      %v1339 = vrot.slane %v1109, 1
      %v1340 = vsel %vm659, %v1337, %v1339
      %v1341 = vrot.slane %v1110, 1
      %v1342 = vrot.slane %v1111, 1
      %v1343 = vsel %vm659, %v1341, %v1342
      %v1344 = vrot.slane %v1112, 1
      %v1345 = vsel %vm659, %v1342, %v1344
      %v1346 = vrot.slane %v1113, 1
      %v1347 = vrot.slane %v1114, 1
      %v1348 = vsel %vm659, %v1346, %v1347
      %v1349 = vrot.slane %v1115, 1
      %v1350 = vsel %vm659, %v1347, %v1349
      %1351 = vrot.lane.b32.xlu0 %v1313, 32
      %v1352 = vpop.permute.xlu0 %1351
      %1353 = vrot.lane.b32.xlu0 %v1315, 32
      %v1354 = vpop.permute.xlu0 %1353
      %1355 = vrot.lane.b32.xlu0 %v1318, 32
      %v1356 = vpop.permute.xlu0 %1355
      %1357 = vrot.lane.b32.xlu0 %v1320, 32
      %v1358 = vpop.permute.xlu0 %1357
      %1359 = vrot.lane.b32.xlu0 %v1323, 32
      %v1360 = vpop.permute.xlu0 %1359
      %1361 = vrot.lane.b32.xlu0 %v1325, 32
      %v1362 = vpop.permute.xlu0 %1361
      %1363 = vrot.lane.b32.xlu0 %v1328, 32
      %v1364 = vpop.permute.xlu0 %1363
      %1365 = vrot.lane.b32.xlu0 %v1330, 32
      %v1366 = vpop.permute.xlu0 %1365
      %1367 = vrot.lane.b32.xlu0 %v1333, 32
      %v1368 = vpop.permute.xlu0 %1367
      %1369 = vrot.lane.b32.xlu0 %v1335, 32
      %v1370 = vpop.permute.xlu0 %1369
      %1371 = vrot.lane.b32.xlu0 %v1338, 32
      %v1372 = vpop.permute.xlu0 %1371
      %1373 = vrot.lane.b32.xlu0 %v1340, 32
      %v1374 = vpop.permute.xlu0 %1373
      %1375 = vrot.lane.b32.xlu0 %v1343, 32
      %v1376 = vpop.permute.xlu0 %1375
      %1377 = vrot.lane.b32.xlu0 %v1345, 32
      %v1378 = vpop.permute.xlu0 %1377
      %1379 = vrot.lane.b32.xlu0 %v1348, 32
      %v1380 = vpop.permute.xlu0 %1379
      %1381 = vrot.lane.b32.xlu0 %v1350, 32
      %v1382 = vpop.permute.xlu0 %1381
      %vm1399 = vcmask 294144
      %1400 = vst.msk [vmem:[#allocation4] sm:$0xff] %vm1399, %v1352
      %1401 = vst.msk [vmem:[#allocation4 + $0x8] sm:$0xff] %vm1399, %v1354
      %1402 = vst.msk [vmem:[#allocation4 + $0x10] sm:$0xff] %vm1399, %v1356
      %1403 = vst.msk [vmem:[#allocation4 + $0x18] sm:$0xff] %vm1399, %v1358
      %1404 = vst.msk [vmem:[#allocation4 + $0x20] sm:$0xff] %vm1399, %v1360
      %1405 = vst.msk [vmem:[#allocation4 + $0x28] sm:$0xff] %vm1399, %v1362
      %1406 = vst.msk [vmem:[#allocation4 + $0x30] sm:$0xff] %vm1399, %v1364
      %1407 = vst.msk [vmem:[#allocation4 + $0x38] sm:$0xff] %vm1399, %v1366
      %1408 = vst.msk [vmem:[#allocation4 + $0x40] sm:$0xff] %vm1399, %v1368
      %1409 = vst.msk [vmem:[#allocation4 + $0x48] sm:$0xff] %vm1399, %v1370
      %1410 = vst.msk [vmem:[#allocation4 + $0x50] sm:$0xff] %vm1399, %v1372
      %1411 = vst.msk [vmem:[#allocation4 + $0x58] sm:$0xff] %vm1399, %v1374
      %1412 = vst.msk [vmem:[#allocation4 + $0x60] sm:$0xff] %vm1399, %v1376
      %1413 = vst.msk [vmem:[#allocation4 + $0x68] sm:$0xff] %vm1399, %v1378
      %1414 = vst.msk [vmem:[#allocation4 + $0x70] sm:$0xff] %vm1399, %v1380
      %1415 = vst.msk [vmem:[#allocation4 + $0x78] sm:$0xff] %vm1399, %v1382
      %v1424 = vrot.slane %v1117, 1
      %v1425 = vrot.slane %v1118, 1
      %v1426 = vsel %vm659, %v1424, %v1425
      %v1427 = vrot.slane %v1119, 1
      %v1428 = vsel %vm659, %v1425, %v1427
      %v1429 = vrot.slane %v1120, 1
      %v1430 = vrot.slane %v1121, 1
      %v1431 = vsel %vm659, %v1429, %v1430
      %v1432 = vrot.slane %v1122, 1
      %v1433 = vsel %vm659, %v1430, %v1432
      %v1434 = vrot.slane %v1123, 1
      %v1435 = vrot.slane %v1124, 1
      %v1436 = vsel %vm659, %v1434, %v1435
      %v1437 = vrot.slane %v1125, 1
      %v1438 = vsel %vm659, %v1435, %v1437
      %v1439 = vrot.slane %v1126, 1
      %v1440 = vrot.slane %v1127, 1
      %v1441 = vsel %vm659, %v1439, %v1440
      %v1442 = vrot.slane %v1128, 1
      %v1443 = vsel %vm659, %v1440, %v1442
      %v1444 = vrot.slane %v1129, 1
      %v1445 = vrot.slane %v1130, 1
      %v1446 = vsel %vm659, %v1444, %v1445
      %v1447 = vrot.slane %v1131, 1
      %v1448 = vsel %vm659, %v1445, %v1447
      %v1449 = vrot.slane %v1132, 1
      %v1450 = vrot.slane %v1133, 1
      %v1451 = vsel %vm659, %v1449, %v1450
      %v1452 = vrot.slane %v1134, 1
      %v1453 = vsel %vm659, %v1450, %v1452
      %v1454 = vrot.slane %v1135, 1
      %v1455 = vrot.slane %v1136, 1
      %v1456 = vsel %vm659, %v1454, %v1455
      %v1457 = vrot.slane %v1137, 1
      %v1458 = vsel %vm659, %v1455, %v1457
      %v1459 = vrot.slane %v1138, 1
      %v1460 = vrot.slane %v1139, 1
      %v1461 = vsel %vm659, %v1459, %v1460
      %v1462 = vrot.slane %v1140, 1
      %v1463 = vsel %vm659, %v1460, %v1462
      %1464 = vrot.lane.b32.xlu0 %v1426, 36
      %v1465 = vpop.permute.xlu0 %1464
      %1466 = vrot.lane.b32.xlu0 %v1428, 36
      %v1467 = vpop.permute.xlu0 %1466
      %1468 = vrot.lane.b32.xlu0 %v1431, 36
      %v1469 = vpop.permute.xlu0 %1468
      %1470 = vrot.lane.b32.xlu0 %v1433, 36
      %v1471 = vpop.permute.xlu0 %1470
      %1472 = vrot.lane.b32.xlu0 %v1436, 36
      %v1473 = vpop.permute.xlu0 %1472
      %1474 = vrot.lane.b32.xlu0 %v1438, 36
      %v1475 = vpop.permute.xlu0 %1474
      %1476 = vrot.lane.b32.xlu0 %v1441, 36
      %v1477 = vpop.permute.xlu0 %1476
      %1478 = vrot.lane.b32.xlu0 %v1443, 36
      %v1479 = vpop.permute.xlu0 %1478
      %1480 = vrot.lane.b32.xlu0 %v1446, 36
      %v1481 = vpop.permute.xlu0 %1480
      %1482 = vrot.lane.b32.xlu0 %v1448, 36
      %v1483 = vpop.permute.xlu0 %1482
      %1484 = vrot.lane.b32.xlu0 %v1451, 36
      %v1485 = vpop.permute.xlu0 %1484
      %1486 = vrot.lane.b32.xlu0 %v1453, 36
      %v1487 = vpop.permute.xlu0 %1486
      %1488 = vrot.lane.b32.xlu0 %v1456, 36
      %v1489 = vpop.permute.xlu0 %1488
      %1490 = vrot.lane.b32.xlu0 %v1458, 36
      %v1491 = vpop.permute.xlu0 %1490
      %1492 = vrot.lane.b32.xlu0 %v1461, 36
      %v1493 = vpop.permute.xlu0 %1492
      %1494 = vrot.lane.b32.xlu0 %v1463, 36
      %v1495 = vpop.permute.xlu0 %1494
      %vm1512 = vcmask 326944
      %1513 = vst.msk [vmem:[#allocation4] sm:$0xff] %vm1512, %v1465
      %1514 = vst.msk [vmem:[#allocation4 + $0x8] sm:$0xff] %vm1512, %v1467
      %1515 = vst.msk [vmem:[#allocation4 + $0x10] sm:$0xff] %vm1512, %v1469
      %1516 = vst.msk [vmem:[#allocation4 + $0x18] sm:$0xff] %vm1512, %v1471
      %1517 = vst.msk [vmem:[#allocation4 + $0x20] sm:$0xff] %vm1512, %v1473
      %1518 = vst.msk [vmem:[#allocation4 + $0x28] sm:$0xff] %vm1512, %v1475
      %1519 = vst.msk [vmem:[#allocation4 + $0x30] sm:$0xff] %vm1512, %v1477
      %1520 = vst.msk [vmem:[#allocation4 + $0x38] sm:$0xff] %vm1512, %v1479
      %1521 = vst.msk [vmem:[#allocation4 + $0x40] sm:$0xff] %vm1512, %v1481
      %1522 = vst.msk [vmem:[#allocation4 + $0x48] sm:$0xff] %vm1512, %v1483
      %1523 = vst.msk [vmem:[#allocation4 + $0x50] sm:$0xff] %vm1512, %v1485
      %1524 = vst.msk [vmem:[#allocation4 + $0x58] sm:$0xff] %vm1512, %v1487
      %1525 = vst.msk [vmem:[#allocation4 + $0x60] sm:$0xff] %vm1512, %v1489
      %1526 = vst.msk [vmem:[#allocation4 + $0x68] sm:$0xff] %vm1512, %v1491
      %1527 = vst.msk [vmem:[#allocation4 + $0x70] sm:$0xff] %vm1512, %v1493
      %1528 = vst.msk [vmem:[#allocation4 + $0x78] sm:$0xff] %vm1512, %v1495
      %v1529 = vrot.slane %v1092, 2
      %v1530 = vrot.slane %v1093, 2
      %v1531 = vsel %vm878, %v1529, %v1530
      %v1532 = vrot.slane %v1094, 2
      %v1533 = vsel %vm878, %v1530, %v1532
      %v1534 = vrot.slane %v1095, 2
      %v1535 = vrot.slane %v1096, 2
      %v1536 = vsel %vm878, %v1534, %v1535
      %v1537 = vrot.slane %v1097, 2
      %v1538 = vsel %vm878, %v1535, %v1537
      %v1539 = vrot.slane %v1098, 2
      %v1540 = vrot.slane %v1099, 2
      %v1541 = vsel %vm878, %v1539, %v1540
      %v1542 = vrot.slane %v1100, 2
      %v1543 = vsel %vm878, %v1540, %v1542
      %v1544 = vrot.slane %v1101, 2
      %v1545 = vrot.slane %v1102, 2
      %v1546 = vsel %vm878, %v1544, %v1545
      %v1547 = vrot.slane %v1103, 2
      %v1548 = vsel %vm878, %v1545, %v1547
      %v1549 = vrot.slane %v1104, 2
      %v1550 = vrot.slane %v1105, 2
      %v1551 = vsel %vm878, %v1549, %v1550
      %v1552 = vrot.slane %v1106, 2
      %v1553 = vsel %vm878, %v1550, %v1552
      %v1554 = vrot.slane %v1107, 2
      %v1555 = vrot.slane %v1108, 2
      %v1556 = vsel %vm878, %v1554, %v1555
      %v1557 = vrot.slane %v1109, 2
      %v1558 = vsel %vm878, %v1555, %v1557
      %v1559 = vrot.slane %v1110, 2
      %v1560 = vrot.slane %v1111, 2
      %v1561 = vsel %vm878, %v1559, %v1560
      %v1562 = vrot.slane %v1112, 2
      %v1563 = vsel %vm878, %v1560, %v1562
      %v1564 = vrot.slane %v1113, 2
      %v1565 = vrot.slane %v1114, 2
      %v1566 = vsel %vm878, %v1564, %v1565
      %v1567 = vrot.slane %v1115, 2
      %v1568 = vsel %vm878, %v1565, %v1567
      %1569 = vrot.lane.b32.xlu0 %v1531, 40
      %v1570 = vpop.permute.xlu0 %1569
      %1571 = vrot.lane.b32.xlu0 %v1533, 40
      %v1572 = vpop.permute.xlu0 %1571
      %1573 = vrot.lane.b32.xlu0 %v1536, 40
      %v1574 = vpop.permute.xlu0 %1573
      %1575 = vrot.lane.b32.xlu0 %v1538, 40
      %v1576 = vpop.permute.xlu0 %1575
      %1577 = vrot.lane.b32.xlu0 %v1541, 40
      %v1578 = vpop.permute.xlu0 %1577
      %1579 = vrot.lane.b32.xlu0 %v1543, 40
      %v1580 = vpop.permute.xlu0 %1579
      %1581 = vrot.lane.b32.xlu0 %v1546, 40
      %v1582 = vpop.permute.xlu0 %1581
      %1583 = vrot.lane.b32.xlu0 %v1548, 40
      %v1584 = vpop.permute.xlu0 %1583
      %1585 = vrot.lane.b32.xlu0 %v1551, 40
      %v1586 = vpop.permute.xlu0 %1585
      %1587 = vrot.lane.b32.xlu0 %v1553, 40
      %v1588 = vpop.permute.xlu0 %1587
      %1589 = vrot.lane.b32.xlu0 %v1556, 40
      %v1590 = vpop.permute.xlu0 %1589
      %1591 = vrot.lane.b32.xlu0 %v1558, 40
      %v1592 = vpop.permute.xlu0 %1591
      %1593 = vrot.lane.b32.xlu0 %v1561, 40
      %v1594 = vpop.permute.xlu0 %1593
      %1595 = vrot.lane.b32.xlu0 %v1563, 40
      %v1596 = vpop.permute.xlu0 %1595
      %1597 = vrot.lane.b32.xlu0 %v1566, 40
      %v1598 = vpop.permute.xlu0 %1597
      %1599 = vrot.lane.b32.xlu0 %v1568, 40
      %v1600 = vpop.permute.xlu0 %1599
      %vm1617 = vcmask 359744
      %1618 = vst.msk [vmem:[#allocation4] sm:$0xff] %vm1617, %v1570
      %1619 = vst.msk [vmem:[#allocation4 + $0x8] sm:$0xff] %vm1617, %v1572
      %1620 = vst.msk [vmem:[#allocation4 + $0x10] sm:$0xff] %vm1617, %v1574
      %1621 = vst.msk [vmem:[#allocation4 + $0x18] sm:$0xff] %vm1617, %v1576
      %1622 = vst.msk [vmem:[#allocation4 + $0x20] sm:$0xff] %vm1617, %v1578
      %1623 = vst.msk [vmem:[#allocation4 + $0x28] sm:$0xff] %vm1617, %v1580
      %1624 = vst.msk [vmem:[#allocation4 + $0x30] sm:$0xff] %vm1617, %v1582
      %1625 = vst.msk [vmem:[#allocation4 + $0x38] sm:$0xff] %vm1617, %v1584
      %1626 = vst.msk [vmem:[#allocation4 + $0x40] sm:$0xff] %vm1617, %v1586
      %1627 = vst.msk [vmem:[#allocation4 + $0x48] sm:$0xff] %vm1617, %v1588
      %1628 = vst.msk [vmem:[#allocation4 + $0x50] sm:$0xff] %vm1617, %v1590
      %1629 = vst.msk [vmem:[#allocation4 + $0x58] sm:$0xff] %vm1617, %v1592
      %1630 = vst.msk [vmem:[#allocation4 + $0x60] sm:$0xff] %vm1617, %v1594
      %1631 = vst.msk [vmem:[#allocation4 + $0x68] sm:$0xff] %vm1617, %v1596
      %1632 = vst.msk [vmem:[#allocation4 + $0x70] sm:$0xff] %vm1617, %v1598
      %1633 = vst.msk [vmem:[#allocation4 + $0x78] sm:$0xff] %vm1617, %v1600
      %v1634 = vrot.slane %v1117, 2
      %v1635 = vrot.slane %v1118, 2
      %v1636 = vsel %vm878, %v1634, %v1635
      %v1637 = vrot.slane %v1119, 2
      %v1638 = vsel %vm878, %v1635, %v1637
      %v1639 = vrot.slane %v1120, 2
      %v1640 = vrot.slane %v1121, 2
      %v1641 = vsel %vm878, %v1639, %v1640
      %v1642 = vrot.slane %v1122, 2
      %v1643 = vsel %vm878, %v1640, %v1642
      %v1644 = vrot.slane %v1123, 2
      %v1645 = vrot.slane %v1124, 2
      %v1646 = vsel %vm878, %v1644, %v1645
      %v1647 = vrot.slane %v1125, 2
      %v1648 = vsel %vm878, %v1645, %v1647
      %v1649 = vrot.slane %v1126, 2
      %v1650 = vrot.slane %v1127, 2
      %v1651 = vsel %vm878, %v1649, %v1650
      %v1652 = vrot.slane %v1128, 2
      %v1653 = vsel %vm878, %v1650, %v1652
      %v1654 = vrot.slane %v1129, 2
      %v1655 = vrot.slane %v1130, 2
      %v1656 = vsel %vm878, %v1654, %v1655
      %v1657 = vrot.slane %v1131, 2
      %v1658 = vsel %vm878, %v1655, %v1657
      %v1659 = vrot.slane %v1132, 2
      %v1660 = vrot.slane %v1133, 2
      %v1661 = vsel %vm878, %v1659, %v1660
      %v1662 = vrot.slane %v1134, 2
      %v1663 = vsel %vm878, %v1660, %v1662
      %v1664 = vrot.slane %v1135, 2
      %v1665 = vrot.slane %v1136, 2
      %v1666 = vsel %vm878, %v1664, %v1665
      %v1667 = vrot.slane %v1137, 2
      %v1668 = vsel %vm878, %v1665, %v1667
      %v1669 = vrot.slane %v1138, 2
      %v1670 = vrot.slane %v1139, 2
      %v1671 = vsel %vm878, %v1669, %v1670
      %v1672 = vrot.slane %v1140, 2
      %v1673 = vsel %vm878, %v1670, %v1672
      %1674 = vrot.lane.b32.xlu0 %v1636, 44
      %v1675 = vpop.permute.xlu0 %1674
      %1676 = vrot.lane.b32.xlu0 %v1638, 44
      %v1677 = vpop.permute.xlu0 %1676
      %1678 = vrot.lane.b32.xlu0 %v1641, 44
      %v1679 = vpop.permute.xlu0 %1678
      %1680 = vrot.lane.b32.xlu0 %v1643, 44
      %v1681 = vpop.permute.xlu0 %1680
      %1682 = vrot.lane.b32.xlu0 %v1646, 44
      %v1683 = vpop.permute.xlu0 %1682
      %1684 = vrot.lane.b32.xlu0 %v1648, 44
      %v1685 = vpop.permute.xlu0 %1684
      %1686 = vrot.lane.b32.xlu0 %v1651, 44
      %v1687 = vpop.permute.xlu0 %1686
      %1688 = vrot.lane.b32.xlu0 %v1653, 44
      %v1689 = vpop.permute.xlu0 %1688
      %1690 = vrot.lane.b32.xlu0 %v1656, 44
      %v1691 = vpop.permute.xlu0 %1690
      %1692 = vrot.lane.b32.xlu0 %v1658, 44
      %v1693 = vpop.permute.xlu0 %1692
      %1694 = vrot.lane.b32.xlu0 %v1661, 44
      %v1695 = vpop.permute.xlu0 %1694
      %1696 = vrot.lane.b32.xlu0 %v1663, 44
      %v1697 = vpop.permute.xlu0 %1696
      %1698 = vrot.lane.b32.xlu0 %v1666, 44
      %v1699 = vpop.permute.xlu0 %1698
      %1700 = vrot.lane.b32.xlu0 %v1668, 44
      %v1701 = vpop.permute.xlu0 %1700
      %1702 = vrot.lane.b32.xlu0 %v1671, 44
      %v1703 = vpop.permute.xlu0 %1702
      %1704 = vrot.lane.b32.xlu0 %v1673, 44
      %v1705 = vpop.permute.xlu0 %1704
      %vm1722 = vcmask 392544
      %1723 = vst.msk [vmem:[#allocation4] sm:$0xff] %vm1722, %v1675
      %1724 = vst.msk [vmem:[#allocation4 + $0x8] sm:$0xff] %vm1722, %v1677
      %1725 = vst.msk [vmem:[#allocation4 + $0x10] sm:$0xff] %vm1722, %v1679
      %1726 = vst.msk [vmem:[#allocation4 + $0x18] sm:$0xff] %vm1722, %v1681
      %1727 = vst.msk [vmem:[#allocation4 + $0x20] sm:$0xff] %vm1722, %v1683
      %1728 = vst.msk [vmem:[#allocation4 + $0x28] sm:$0xff] %vm1722, %v1685
      %1729 = vst.msk [vmem:[#allocation4 + $0x30] sm:$0xff] %vm1722, %v1687
      %1730 = vst.msk [vmem:[#allocation4 + $0x38] sm:$0xff] %vm1722, %v1689
      %1731 = vst.msk [vmem:[#allocation4 + $0x40] sm:$0xff] %vm1722, %v1691
      %1732 = vst.msk [vmem:[#allocation4 + $0x48] sm:$0xff] %vm1722, %v1693
      %1733 = vst.msk [vmem:[#allocation4 + $0x50] sm:$0xff] %vm1722, %v1695
      %1734 = vst.msk [vmem:[#allocation4 + $0x58] sm:$0xff] %vm1722, %v1697
      %1735 = vst.msk [vmem:[#allocation4 + $0x60] sm:$0xff] %vm1722, %v1699
      %1736 = vst.msk [vmem:[#allocation4 + $0x68] sm:$0xff] %vm1722, %v1701
      %1737 = vst.msk [vmem:[#allocation4 + $0x70] sm:$0xff] %vm1722, %v1703
      %1738 = vst.msk [vmem:[#allocation4 + $0x78] sm:$0xff] %vm1722, %v1705
      %s1739 = sadd.s32 %s485, 2
      %s1740 = smul.u32 %s1739, 24
      %s1741 = scalar_lea.vmem [#allocation2], %s1740
      %v1742 = vld [vmem:[%s1741] sm:$0xff]
      %v1743 = vld [vmem:[%s1741 + $0x8] sm:$0xff]
      %v1744 = vld [vmem:[%s1741 + $0x10] sm:$0x3]
      %v1745 = vld [vmem:[%s1741 + $0x18] sm:$0xff]
      %v1746 = vld [vmem:[%s1741 + $0x20] sm:$0xff]
      %v1747 = vld [vmem:[%s1741 + $0x28] sm:$0x3]
      %v1748 = vld [vmem:[%s1741 + $0x30] sm:$0xff]
      %v1749 = vld [vmem:[%s1741 + $0x38] sm:$0xff]
      %v1750 = vld [vmem:[%s1741 + $0x40] sm:$0x3]
      %v1751 = vld [vmem:[%s1741 + $0x48] sm:$0xff]
      %v1752 = vld [vmem:[%s1741 + $0x50] sm:$0xff]
      %v1753 = vld [vmem:[%s1741 + $0x58] sm:$0x3]
      %v1754 = vld [vmem:[%s1741 + $0x60] sm:$0xff]
      %v1755 = vld [vmem:[%s1741 + $0x68] sm:$0xff]
      %v1756 = vld [vmem:[%s1741 + $0x70] sm:$0x3]
      %v1757 = vld [vmem:[%s1741 + $0x78] sm:$0xff]
      %v1758 = vld [vmem:[%s1741 + $0x80] sm:$0xff]
      %v1759 = vld [vmem:[%s1741 + $0x88] sm:$0x3]
      %v1760 = vld [vmem:[%s1741 + $0x90] sm:$0xff]
      %v1761 = vld [vmem:[%s1741 + $0x98] sm:$0xff]
      %v1762 = vld [vmem:[%s1741 + $0xa0] sm:$0x3]
      %v1763 = vld [vmem:[%s1741 + $0xa8] sm:$0xff]
      %v1764 = vld [vmem:[%s1741 + $0xb0] sm:$0xff]
      %v1765 = vld [vmem:[%s1741 + $0xb8] sm:$0x3]
      %s1766 = scalar_lea.vmem [#allocation3], %s1740
      %v1767 = vld [vmem:[%s1766] sm:$0xff]
      %v1768 = vld [vmem:[%s1766 + $0x8] sm:$0xff]
      %v1769 = vld [vmem:[%s1766 + $0x10] sm:$0x3]
      %v1770 = vld [vmem:[%s1766 + $0x18] sm:$0xff]
      %v1771 = vld [vmem:[%s1766 + $0x20] sm:$0xff]
      %v1772 = vld [vmem:[%s1766 + $0x28] sm:$0x3]
      %v1773 = vld [vmem:[%s1766 + $0x30] sm:$0xff]
      %v1774 = vld [vmem:[%s1766 + $0x38] sm:$0xff]
      %v1775 = vld [vmem:[%s1766 + $0x40] sm:$0x3]
      %v1776 = vld [vmem:[%s1766 + $0x48] sm:$0xff]
      %v1777 = vld [vmem:[%s1766 + $0x50] sm:$0xff]
      %v1778 = vld [vmem:[%s1766 + $0x58] sm:$0x3]
      %v1779 = vld [vmem:[%s1766 + $0x60] sm:$0xff]
      %v1780 = vld [vmem:[%s1766 + $0x68] sm:$0xff]
      %v1781 = vld [vmem:[%s1766 + $0x70] sm:$0x3]
      %v1782 = vld [vmem:[%s1766 + $0x78] sm:$0xff]
      %v1783 = vld [vmem:[%s1766 + $0x80] sm:$0xff]
      %v1784 = vld [vmem:[%s1766 + $0x88] sm:$0x3]
      %v1785 = vld [vmem:[%s1766 + $0x90] sm:$0xff]
      %v1786 = vld [vmem:[%s1766 + $0x98] sm:$0xff]
      %v1787 = vld [vmem:[%s1766 + $0xa0] sm:$0x3]
      %v1788 = vld [vmem:[%s1766 + $0xa8] sm:$0xff]
      %v1789 = vld [vmem:[%s1766 + $0xb0] sm:$0xff]
      %v1790 = vld [vmem:[%s1766 + $0xb8] sm:$0x3]
      %1807 = vrot.lane.b32.xlu0 %v1742, 48
      %v1808 = vpop.permute.xlu0 %1807
      %1809 = vrot.lane.b32.xlu0 %v1743, 48
      %v1810 = vpop.permute.xlu0 %1809
      %1811 = vrot.lane.b32.xlu0 %v1745, 48
      %v1812 = vpop.permute.xlu0 %1811
      %1813 = vrot.lane.b32.xlu0 %v1746, 48
      %v1814 = vpop.permute.xlu0 %1813
      %1815 = vrot.lane.b32.xlu0 %v1748, 48
      %v1816 = vpop.permute.xlu0 %1815
      %1817 = vrot.lane.b32.xlu0 %v1749, 48
      %v1818 = vpop.permute.xlu0 %1817
      %1819 = vrot.lane.b32.xlu0 %v1751, 48
      %v1820 = vpop.permute.xlu0 %1819
      %1821 = vrot.lane.b32.xlu0 %v1752, 48
      %v1822 = vpop.permute.xlu0 %1821
      %1823 = vrot.lane.b32.xlu0 %v1754, 48
      %v1824 = vpop.permute.xlu0 %1823
      %1825 = vrot.lane.b32.xlu0 %v1755, 48
      %v1826 = vpop.permute.xlu0 %1825
      %1827 = vrot.lane.b32.xlu0 %v1757, 48
      %v1828 = vpop.permute.xlu0 %1827
      %1829 = vrot.lane.b32.xlu0 %v1758, 48
      %v1830 = vpop.permute.xlu0 %1829
      %1831 = vrot.lane.b32.xlu0 %v1760, 48
      %v1832 = vpop.permute.xlu0 %1831
      %1833 = vrot.lane.b32.xlu0 %v1761, 48
      %v1834 = vpop.permute.xlu0 %1833
      %1835 = vrot.lane.b32.xlu0 %v1763, 48
      %v1836 = vpop.permute.xlu0 %1835
      %1837 = vrot.lane.b32.xlu0 %v1764, 48
      %v1838 = vpop.permute.xlu0 %1837
      %vm1855 = vcmask 425344
      %1856 = vst.msk [vmem:[#allocation4] sm:$0xff] %vm1855, %v1808
      %1857 = vst.msk [vmem:[#allocation4 + $0x8] sm:$0xff] %vm1855, %v1810
      %1858 = vst.msk [vmem:[#allocation4 + $0x10] sm:$0xff] %vm1855, %v1812
      %1859 = vst.msk [vmem:[#allocation4 + $0x18] sm:$0xff] %vm1855, %v1814
      %1860 = vst.msk [vmem:[#allocation4 + $0x20] sm:$0xff] %vm1855, %v1816
      %1861 = vst.msk [vmem:[#allocation4 + $0x28] sm:$0xff] %vm1855, %v1818
      %1862 = vst.msk [vmem:[#allocation4 + $0x30] sm:$0xff] %vm1855, %v1820
      %1863 = vst.msk [vmem:[#allocation4 + $0x38] sm:$0xff] %vm1855, %v1822
      %1864 = vst.msk [vmem:[#allocation4 + $0x40] sm:$0xff] %vm1855, %v1824
      %1865 = vst.msk [vmem:[#allocation4 + $0x48] sm:$0xff] %vm1855, %v1826
      %1866 = vst.msk [vmem:[#allocation4 + $0x50] sm:$0xff] %vm1855, %v1828
      %1867 = vst.msk [vmem:[#allocation4 + $0x58] sm:$0xff] %vm1855, %v1830
      %1868 = vst.msk [vmem:[#allocation4 + $0x60] sm:$0xff] %vm1855, %v1832
      %1869 = vst.msk [vmem:[#allocation4 + $0x68] sm:$0xff] %vm1855, %v1834
      %1870 = vst.msk [vmem:[#allocation4 + $0x70] sm:$0xff] %vm1855, %v1836
      %1871 = vst.msk [vmem:[#allocation4 + $0x78] sm:$0xff] %vm1855, %v1838
      %1888 = vrot.lane.b32.xlu0 %v1767, 52
      %v1889 = vpop.permute.xlu0 %1888
      %1890 = vrot.lane.b32.xlu0 %v1768, 52
      %v1891 = vpop.permute.xlu0 %1890
      %1892 = vrot.lane.b32.xlu0 %v1770, 52
      %v1893 = vpop.permute.xlu0 %1892
      %1894 = vrot.lane.b32.xlu0 %v1771, 52
      %v1895 = vpop.permute.xlu0 %1894
      %1896 = vrot.lane.b32.xlu0 %v1773, 52
      %v1897 = vpop.permute.xlu0 %1896
      %1898 = vrot.lane.b32.xlu0 %v1774, 52
      %v1899 = vpop.permute.xlu0 %1898
      %1900 = vrot.lane.b32.xlu0 %v1776, 52
      %v1901 = vpop.permute.xlu0 %1900
      %1902 = vrot.lane.b32.xlu0 %v1777, 52
      %v1903 = vpop.permute.xlu0 %1902
      %1904 = vrot.lane.b32.xlu0 %v1779, 52
      %v1905 = vpop.permute.xlu0 %1904
      %1906 = vrot.lane.b32.xlu0 %v1780, 52
      %v1907 = vpop.permute.xlu0 %1906
      %1908 = vrot.lane.b32.xlu0 %v1782, 52
      %v1909 = vpop.permute.xlu0 %1908
      %1910 = vrot.lane.b32.xlu0 %v1783, 52
      %v1911 = vpop.permute.xlu0 %1910
      %1912 = vrot.lane.b32.xlu0 %v1785, 52
      %v1913 = vpop.permute.xlu0 %1912
      %1914 = vrot.lane.b32.xlu0 %v1786, 52
      %v1915 = vpop.permute.xlu0 %1914
      %1916 = vrot.lane.b32.xlu0 %v1788, 52
      %v1917 = vpop.permute.xlu0 %1916
      %1918 = vrot.lane.b32.xlu0 %v1789, 52
      %v1919 = vpop.permute.xlu0 %1918
      %vm1936 = vcmask 458144
      %1937 = vst.msk [vmem:[#allocation4] sm:$0xff] %vm1936, %v1889
      %1938 = vst.msk [vmem:[#allocation4 + $0x8] sm:$0xff] %vm1936, %v1891
      %1939 = vst.msk [vmem:[#allocation4 + $0x10] sm:$0xff] %vm1936, %v1893
      %1940 = vst.msk [vmem:[#allocation4 + $0x18] sm:$0xff] %vm1936, %v1895
      %1941 = vst.msk [vmem:[#allocation4 + $0x20] sm:$0xff] %vm1936, %v1897
      %1942 = vst.msk [vmem:[#allocation4 + $0x28] sm:$0xff] %vm1936, %v1899
      %1943 = vst.msk [vmem:[#allocation4 + $0x30] sm:$0xff] %vm1936, %v1901
      %1944 = vst.msk [vmem:[#allocation4 + $0x38] sm:$0xff] %vm1936, %v1903
      %1945 = vst.msk [vmem:[#allocation4 + $0x40] sm:$0xff] %vm1936, %v1905
      %1946 = vst.msk [vmem:[#allocation4 + $0x48] sm:$0xff] %vm1936, %v1907
      %1947 = vst.msk [vmem:[#allocation4 + $0x50] sm:$0xff] %vm1936, %v1909
      %1948 = vst.msk [vmem:[#allocation4 + $0x58] sm:$0xff] %vm1936, %v1911
      %1949 = vst.msk [vmem:[#allocation4 + $0x60] sm:$0xff] %vm1936, %v1913
      %1950 = vst.msk [vmem:[#allocation4 + $0x68] sm:$0xff] %vm1936, %v1915
      %1951 = vst.msk [vmem:[#allocation4 + $0x70] sm:$0xff] %vm1936, %v1917
      %1952 = vst.msk [vmem:[#allocation4 + $0x78] sm:$0xff] %vm1936, %v1919
      %v1961 = vrot.slane %v1742, 1
      %v1962 = vrot.slane %v1743, 1
      %v1963 = vsel %vm659, %v1961, %v1962
      %v1964 = vrot.slane %v1744, 1
      %v1965 = vsel %vm659, %v1962, %v1964
      %v1966 = vrot.slane %v1745, 1
      %v1967 = vrot.slane %v1746, 1
      %v1968 = vsel %vm659, %v1966, %v1967
      %v1969 = vrot.slane %v1747, 1
      %v1970 = vsel %vm659, %v1967, %v1969
      %v1971 = vrot.slane %v1748, 1
      %v1972 = vrot.slane %v1749, 1
      %v1973 = vsel %vm659, %v1971, %v1972
      %v1974 = vrot.slane %v1750, 1
      %v1975 = vsel %vm659, %v1972, %v1974
      %v1976 = vrot.slane %v1751, 1
      %v1977 = vrot.slane %v1752, 1
      %v1978 = vsel %vm659, %v1976, %v1977
      %v1979 = vrot.slane %v1753, 1
      %v1980 = vsel %vm659, %v1977, %v1979
      %v1981 = vrot.slane %v1754, 1
      %v1982 = vrot.slane %v1755, 1
      %v1983 = vsel %vm659, %v1981, %v1982
      %v1984 = vrot.slane %v1756, 1
      %v1985 = vsel %vm659, %v1982, %v1984
      %v1986 = vrot.slane %v1757, 1
      %v1987 = vrot.slane %v1758, 1
      %v1988 = vsel %vm659, %v1986, %v1987
      %v1989 = vrot.slane %v1759, 1
      %v1990 = vsel %vm659, %v1987, %v1989
      %v1991 = vrot.slane %v1760, 1
      %v1992 = vrot.slane %v1761, 1
      %v1993 = vsel %vm659, %v1991, %v1992
      %v1994 = vrot.slane %v1762, 1
      %v1995 = vsel %vm659, %v1992, %v1994
      %v1996 = vrot.slane %v1763, 1
      %v1997 = vrot.slane %v1764, 1
      %v1998 = vsel %vm659, %v1996, %v1997
      %v1999 = vrot.slane %v1765, 1
      %v2000 = vsel %vm659, %v1997, %v1999
      %2001 = vrot.lane.b32.xlu0 %v1963, 56
      %v2002 = vpop.permute.xlu0 %2001
      %2003 = vrot.lane.b32.xlu0 %v1965, 56
      %v2004 = vpop.permute.xlu0 %2003
      %2005 = vrot.lane.b32.xlu0 %v1968, 56
      %v2006 = vpop.permute.xlu0 %2005
      %2007 = vrot.lane.b32.xlu0 %v1970, 56
      %v2008 = vpop.permute.xlu0 %2007
      %2009 = vrot.lane.b32.xlu0 %v1973, 56
      %v2010 = vpop.permute.xlu0 %2009
      %2011 = vrot.lane.b32.xlu0 %v1975, 56
      %v2012 = vpop.permute.xlu0 %2011
      %2013 = vrot.lane.b32.xlu0 %v1978, 56
      %v2014 = vpop.permute.xlu0 %2013
      %2015 = vrot.lane.b32.xlu0 %v1980, 56
      %v2016 = vpop.permute.xlu0 %2015
      %2017 = vrot.lane.b32.xlu0 %v1983, 56
      %v2018 = vpop.permute.xlu0 %2017
      %2019 = vrot.lane.b32.xlu0 %v1985, 56
      %v2020 = vpop.permute.xlu0 %2019
      %2021 = vrot.lane.b32.xlu0 %v1988, 56
      %v2022 = vpop.permute.xlu0 %2021
      %2023 = vrot.lane.b32.xlu0 %v1990, 56
      %v2024 = vpop.permute.xlu0 %2023
      %2025 = vrot.lane.b32.xlu0 %v1993, 56
      %v2026 = vpop.permute.xlu0 %2025
      %2027 = vrot.lane.b32.xlu0 %v1995, 56
      %v2028 = vpop.permute.xlu0 %2027
      %2029 = vrot.lane.b32.xlu0 %v1998, 56
      %v2030 = vpop.permute.xlu0 %2029
      %2031 = vrot.lane.b32.xlu0 %v2000, 56
      %v2032 = vpop.permute.xlu0 %2031
      %vm2049 = vcmask 490944
      %2050 = vst.msk [vmem:[#allocation4] sm:$0xff] %vm2049, %v2002
      %2051 = vst.msk [vmem:[#allocation4 + $0x8] sm:$0xff] %vm2049, %v2004
      %2052 = vst.msk [vmem:[#allocation4 + $0x10] sm:$0xff] %vm2049, %v2006
      %2053 = vst.msk [vmem:[#allocation4 + $0x18] sm:$0xff] %vm2049, %v2008
      %2054 = vst.msk [vmem:[#allocation4 + $0x20] sm:$0xff] %vm2049, %v2010
      %2055 = vst.msk [vmem:[#allocation4 + $0x28] sm:$0xff] %vm2049, %v2012
      %2056 = vst.msk [vmem:[#allocation4 + $0x30] sm:$0xff] %vm2049, %v2014
      %2057 = vst.msk [vmem:[#allocation4 + $0x38] sm:$0xff] %vm2049, %v2016
      %2058 = vst.msk [vmem:[#allocation4 + $0x40] sm:$0xff] %vm2049, %v2018
      %2059 = vst.msk [vmem:[#allocation4 + $0x48] sm:$0xff] %vm2049, %v2020
      %2060 = vst.msk [vmem:[#allocation4 + $0x50] sm:$0xff] %vm2049, %v2022
      %2061 = vst.msk [vmem:[#allocation4 + $0x58] sm:$0xff] %vm2049, %v2024
      %2062 = vst.msk [vmem:[#allocation4 + $0x60] sm:$0xff] %vm2049, %v2026
      %2063 = vst.msk [vmem:[#allocation4 + $0x68] sm:$0xff] %vm2049, %v2028
      %2064 = vst.msk [vmem:[#allocation4 + $0x70] sm:$0xff] %vm2049, %v2030
      %2065 = vst.msk [vmem:[#allocation4 + $0x78] sm:$0xff] %vm2049, %v2032
      %v2074 = vrot.slane %v1767, 1
      %v2075 = vrot.slane %v1768, 1
      %v2076 = vsel %vm659, %v2074, %v2075
      %v2077 = vrot.slane %v1769, 1
      %v2078 = vsel %vm659, %v2075, %v2077
      %v2079 = vrot.slane %v1770, 1
      %v2080 = vrot.slane %v1771, 1
      %v2081 = vsel %vm659, %v2079, %v2080
      %v2082 = vrot.slane %v1772, 1
      %v2083 = vsel %vm659, %v2080, %v2082
      %v2084 = vrot.slane %v1773, 1
      %v2085 = vrot.slane %v1774, 1
      %v2086 = vsel %vm659, %v2084, %v2085
      %v2087 = vrot.slane %v1775, 1
      %v2088 = vsel %vm659, %v2085, %v2087
      %v2089 = vrot.slane %v1776, 1
      %v2090 = vrot.slane %v1777, 1
      %v2091 = vsel %vm659, %v2089, %v2090
      %v2092 = vrot.slane %v1778, 1
      %v2093 = vsel %vm659, %v2090, %v2092
      %v2094 = vrot.slane %v1779, 1
      %v2095 = vrot.slane %v1780, 1
      %v2096 = vsel %vm659, %v2094, %v2095
      %v2097 = vrot.slane %v1781, 1
      %v2098 = vsel %vm659, %v2095, %v2097
      %v2099 = vrot.slane %v1782, 1
      %v2100 = vrot.slane %v1783, 1
      %v2101 = vsel %vm659, %v2099, %v2100
      %v2102 = vrot.slane %v1784, 1
      %v2103 = vsel %vm659, %v2100, %v2102
      %v2104 = vrot.slane %v1785, 1
      %v2105 = vrot.slane %v1786, 1
      %v2106 = vsel %vm659, %v2104, %v2105
      %v2107 = vrot.slane %v1787, 1
      %v2108 = vsel %vm659, %v2105, %v2107
      %v2109 = vrot.slane %v1788, 1
      %v2110 = vrot.slane %v1789, 1
      %v2111 = vsel %vm659, %v2109, %v2110
      %v2112 = vrot.slane %v1790, 1
      %v2113 = vsel %vm659, %v2110, %v2112
      %2114 = vrot.lane.b32.xlu0 %v2076, 60
      %v2115 = vpop.permute.xlu0 %2114
      %2116 = vrot.lane.b32.xlu0 %v2078, 60
      %v2117 = vpop.permute.xlu0 %2116
      %2118 = vrot.lane.b32.xlu0 %v2081, 60
      %v2119 = vpop.permute.xlu0 %2118
      %2120 = vrot.lane.b32.xlu0 %v2083, 60
      %v2121 = vpop.permute.xlu0 %2120
      %2122 = vrot.lane.b32.xlu0 %v2086, 60
      %v2123 = vpop.permute.xlu0 %2122
      %2124 = vrot.lane.b32.xlu0 %v2088, 60
      %v2125 = vpop.permute.xlu0 %2124
      %2126 = vrot.lane.b32.xlu0 %v2091, 60
      %v2127 = vpop.permute.xlu0 %2126
      %2128 = vrot.lane.b32.xlu0 %v2093, 60
      %v2129 = vpop.permute.xlu0 %2128
      %2130 = vrot.lane.b32.xlu0 %v2096, 60
      %v2131 = vpop.permute.xlu0 %2130
      %2132 = vrot.lane.b32.xlu0 %v2098, 60
      %v2133 = vpop.permute.xlu0 %2132
      %2134 = vrot.lane.b32.xlu0 %v2101, 60
      %v2135 = vpop.permute.xlu0 %2134
      %2136 = vrot.lane.b32.xlu0 %v2103, 60
      %v2137 = vpop.permute.xlu0 %2136
      %2138 = vrot.lane.b32.xlu0 %v2106, 60
      %v2139 = vpop.permute.xlu0 %2138
      %2140 = vrot.lane.b32.xlu0 %v2108, 60
      %v2141 = vpop.permute.xlu0 %2140
      %2142 = vrot.lane.b32.xlu0 %v2111, 60
      %v2143 = vpop.permute.xlu0 %2142
      %2144 = vrot.lane.b32.xlu0 %v2113, 60
      %v2145 = vpop.permute.xlu0 %2144
      %vm2162 = vcmask 523744
      %2163 = vst.msk [vmem:[#allocation4] sm:$0xff] %vm2162, %v2115
      %2164 = vst.msk [vmem:[#allocation4 + $0x8] sm:$0xff] %vm2162, %v2117
      %2165 = vst.msk [vmem:[#allocation4 + $0x10] sm:$0xff] %vm2162, %v2119
      %2166 = vst.msk [vmem:[#allocation4 + $0x18] sm:$0xff] %vm2162, %v2121
      %2167 = vst.msk [vmem:[#allocation4 + $0x20] sm:$0xff] %vm2162, %v2123
      %2168 = vst.msk [vmem:[#allocation4 + $0x28] sm:$0xff] %vm2162, %v2125
      %2169 = vst.msk [vmem:[#allocation4 + $0x30] sm:$0xff] %vm2162, %v2127
      %2170 = vst.msk [vmem:[#allocation4 + $0x38] sm:$0xff] %vm2162, %v2129
      %2171 = vst.msk [vmem:[#allocation4 + $0x40] sm:$0xff] %vm2162, %v2131
      %2172 = vst.msk [vmem:[#allocation4 + $0x48] sm:$0xff] %vm2162, %v2133
      %2173 = vst.msk [vmem:[#allocation4 + $0x50] sm:$0xff] %vm2162, %v2135
      %2174 = vst.msk [vmem:[#allocation4 + $0x58] sm:$0xff] %vm2162, %v2137
      %2175 = vst.msk [vmem:[#allocation4 + $0x60] sm:$0xff] %vm2162, %v2139
      %2176 = vst.msk [vmem:[#allocation4 + $0x68] sm:$0xff] %vm2162, %v2141
      %2177 = vst.msk [vmem:[#allocation4 + $0x70] sm:$0xff] %vm2162, %v2143
      %2178 = vst.msk [vmem:[#allocation4 + $0x78] sm:$0xff] %vm2162, %v2145
      %v2179 = vrot.slane %v1742, 2
      %v2180 = vrot.slane %v1743, 2
      %v2181 = vsel %vm878, %v2179, %v2180
      %v2182 = vrot.slane %v1744, 2
      %v2183 = vsel %vm878, %v2180, %v2182
      %v2184 = vrot.slane %v1745, 2
      %v2185 = vrot.slane %v1746, 2
      %v2186 = vsel %vm878, %v2184, %v2185
      %v2187 = vrot.slane %v1747, 2
      %v2188 = vsel %vm878, %v2185, %v2187
      %v2189 = vrot.slane %v1748, 2
      %v2190 = vrot.slane %v1749, 2
      %v2191 = vsel %vm878, %v2189, %v2190
      %v2192 = vrot.slane %v1750, 2
      %v2193 = vsel %vm878, %v2190, %v2192
      %v2194 = vrot.slane %v1751, 2
      %v2195 = vrot.slane %v1752, 2
      %v2196 = vsel %vm878, %v2194, %v2195
      %v2197 = vrot.slane %v1753, 2
      %v2198 = vsel %vm878, %v2195, %v2197
      %v2199 = vrot.slane %v1754, 2
      %v2200 = vrot.slane %v1755, 2
      %v2201 = vsel %vm878, %v2199, %v2200
      %v2202 = vrot.slane %v1756, 2
      %v2203 = vsel %vm878, %v2200, %v2202
      %v2204 = vrot.slane %v1757, 2
      %v2205 = vrot.slane %v1758, 2
      %v2206 = vsel %vm878, %v2204, %v2205
      %v2207 = vrot.slane %v1759, 2
      %v2208 = vsel %vm878, %v2205, %v2207
      %v2209 = vrot.slane %v1760, 2
      %v2210 = vrot.slane %v1761, 2
      %v2211 = vsel %vm878, %v2209, %v2210
      %v2212 = vrot.slane %v1762, 2
      %v2213 = vsel %vm878, %v2210, %v2212
      %v2214 = vrot.slane %v1763, 2
      %v2215 = vrot.slane %v1764, 2
      %v2216 = vsel %vm878, %v2214, %v2215
      %v2217 = vrot.slane %v1765, 2
      %v2218 = vsel %vm878, %v2215, %v2217
      %2219 = vrot.lane.b32.xlu0 %v2181, 64
      %v2220 = vpop.permute.xlu0 %2219
      %2221 = vrot.lane.b32.xlu0 %v2183, 64
      %v2222 = vpop.permute.xlu0 %2221
      %2223 = vrot.lane.b32.xlu0 %v2186, 64
      %v2224 = vpop.permute.xlu0 %2223
      %2225 = vrot.lane.b32.xlu0 %v2188, 64
      %v2226 = vpop.permute.xlu0 %2225
      %2227 = vrot.lane.b32.xlu0 %v2191, 64
      %v2228 = vpop.permute.xlu0 %2227
      %2229 = vrot.lane.b32.xlu0 %v2193, 64
      %v2230 = vpop.permute.xlu0 %2229
      %2231 = vrot.lane.b32.xlu0 %v2196, 64
      %v2232 = vpop.permute.xlu0 %2231
      %2233 = vrot.lane.b32.xlu0 %v2198, 64
      %v2234 = vpop.permute.xlu0 %2233
      %2235 = vrot.lane.b32.xlu0 %v2201, 64
      %v2236 = vpop.permute.xlu0 %2235
      %2237 = vrot.lane.b32.xlu0 %v2203, 64
      %v2238 = vpop.permute.xlu0 %2237
      %2239 = vrot.lane.b32.xlu0 %v2206, 64
      %v2240 = vpop.permute.xlu0 %2239
      %2241 = vrot.lane.b32.xlu0 %v2208, 64
      %v2242 = vpop.permute.xlu0 %2241
      %2243 = vrot.lane.b32.xlu0 %v2211, 64
      %v2244 = vpop.permute.xlu0 %2243
      %2245 = vrot.lane.b32.xlu0 %v2213, 64
      %v2246 = vpop.permute.xlu0 %2245
      %2247 = vrot.lane.b32.xlu0 %v2216, 64
      %v2248 = vpop.permute.xlu0 %2247
      %2249 = vrot.lane.b32.xlu0 %v2218, 64
      %v2250 = vpop.permute.xlu0 %2249
      %vm2267 = vcmask 556544
      %2268 = vst.msk [vmem:[#allocation4] sm:$0xff] %vm2267, %v2220
      %2269 = vst.msk [vmem:[#allocation4 + $0x8] sm:$0xff] %vm2267, %v2222
      %2270 = vst.msk [vmem:[#allocation4 + $0x10] sm:$0xff] %vm2267, %v2224
      %2271 = vst.msk [vmem:[#allocation4 + $0x18] sm:$0xff] %vm2267, %v2226
      %2272 = vst.msk [vmem:[#allocation4 + $0x20] sm:$0xff] %vm2267, %v2228
      %2273 = vst.msk [vmem:[#allocation4 + $0x28] sm:$0xff] %vm2267, %v2230
      %2274 = vst.msk [vmem:[#allocation4 + $0x30] sm:$0xff] %vm2267, %v2232
      %2275 = vst.msk [vmem:[#allocation4 + $0x38] sm:$0xff] %vm2267, %v2234
      %2276 = vst.msk [vmem:[#allocation4 + $0x40] sm:$0xff] %vm2267, %v2236
      %2277 = vst.msk [vmem:[#allocation4 + $0x48] sm:$0xff] %vm2267, %v2238
      %2278 = vst.msk [vmem:[#allocation4 + $0x50] sm:$0xff] %vm2267, %v2240
      %2279 = vst.msk [vmem:[#allocation4 + $0x58] sm:$0xff] %vm2267, %v2242
      %2280 = vst.msk [vmem:[#allocation4 + $0x60] sm:$0xff] %vm2267, %v2244
      %2281 = vst.msk [vmem:[#allocation4 + $0x68] sm:$0xff] %vm2267, %v2246
      %2282 = vst.msk [vmem:[#allocation4 + $0x70] sm:$0xff] %vm2267, %v2248
      %2283 = vst.msk [vmem:[#allocation4 + $0x78] sm:$0xff] %vm2267, %v2250
      %v2284 = vrot.slane %v1767, 2
      %v2285 = vrot.slane %v1768, 2
      %v2286 = vsel %vm878, %v2284, %v2285
      %v2287 = vrot.slane %v1769, 2
      %v2288 = vsel %vm878, %v2285, %v2287
      %v2289 = vrot.slane %v1770, 2
      %v2290 = vrot.slane %v1771, 2
      %v2291 = vsel %vm878, %v2289, %v2290
      %v2292 = vrot.slane %v1772, 2
      %v2293 = vsel %vm878, %v2290, %v2292
      %v2294 = vrot.slane %v1773, 2
      %v2295 = vrot.slane %v1774, 2
      %v2296 = vsel %vm878, %v2294, %v2295
      %v2297 = vrot.slane %v1775, 2
      %v2298 = vsel %vm878, %v2295, %v2297
      %v2299 = vrot.slane %v1776, 2
      %v2300 = vrot.slane %v1777, 2
      %v2301 = vsel %vm878, %v2299, %v2300
      %v2302 = vrot.slane %v1778, 2
      %v2303 = vsel %vm878, %v2300, %v2302
      %v2304 = vrot.slane %v1779, 2
      %v2305 = vrot.slane %v1780, 2
      %v2306 = vsel %vm878, %v2304, %v2305
      %v2307 = vrot.slane %v1781, 2
      %v2308 = vsel %vm878, %v2305, %v2307
      %v2309 = vrot.slane %v1782, 2
      %v2310 = vrot.slane %v1783, 2
      %v2311 = vsel %vm878, %v2309, %v2310
      %v2312 = vrot.slane %v1784, 2
      %v2313 = vsel %vm878, %v2310, %v2312
      %v2314 = vrot.slane %v1785, 2
      %v2315 = vrot.slane %v1786, 2
      %v2316 = vsel %vm878, %v2314, %v2315
      %v2317 = vrot.slane %v1787, 2
      %v2318 = vsel %vm878, %v2315, %v2317
      %v2319 = vrot.slane %v1788, 2
      %v2320 = vrot.slane %v1789, 2
      %v2321 = vsel %vm878, %v2319, %v2320
      %v2322 = vrot.slane %v1790, 2
      %v2323 = vsel %vm878, %v2320, %v2322
      %2324 = vrot.lane.b32.xlu0 %v2286, 68
      %v2325 = vpop.permute.xlu0 %2324
      %2326 = vrot.lane.b32.xlu0 %v2288, 68
      %v2327 = vpop.permute.xlu0 %2326
      %2328 = vrot.lane.b32.xlu0 %v2291, 68
      %v2329 = vpop.permute.xlu0 %2328
      %2330 = vrot.lane.b32.xlu0 %v2293, 68
      %v2331 = vpop.permute.xlu0 %2330
      %2332 = vrot.lane.b32.xlu0 %v2296, 68
      %v2333 = vpop.permute.xlu0 %2332
      %2334 = vrot.lane.b32.xlu0 %v2298, 68
      %v2335 = vpop.permute.xlu0 %2334
      %2336 = vrot.lane.b32.xlu0 %v2301, 68
      %v2337 = vpop.permute.xlu0 %2336
      %2338 = vrot.lane.b32.xlu0 %v2303, 68
      %v2339 = vpop.permute.xlu0 %2338
      %2340 = vrot.lane.b32.xlu0 %v2306, 68
      %v2341 = vpop.permute.xlu0 %2340
      %2342 = vrot.lane.b32.xlu0 %v2308, 68
      %v2343 = vpop.permute.xlu0 %2342
      %2344 = vrot.lane.b32.xlu0 %v2311, 68
      %v2345 = vpop.permute.xlu0 %2344
      %2346 = vrot.lane.b32.xlu0 %v2313, 68
      %v2347 = vpop.permute.xlu0 %2346
      %2348 = vrot.lane.b32.xlu0 %v2316, 68
      %v2349 = vpop.permute.xlu0 %2348
      %2350 = vrot.lane.b32.xlu0 %v2318, 68
      %v2351 = vpop.permute.xlu0 %2350
      %2352 = vrot.lane.b32.xlu0 %v2321, 68
      %v2353 = vpop.permute.xlu0 %2352
      %2354 = vrot.lane.b32.xlu0 %v2323, 68
      %v2355 = vpop.permute.xlu0 %2354
      %vm2372 = vcmask 589344
      %2373 = vst.msk [vmem:[#allocation4] sm:$0xff] %vm2372, %v2325
      %2374 = vst.msk [vmem:[#allocation4 + $0x8] sm:$0xff] %vm2372, %v2327
      %2375 = vst.msk [vmem:[#allocation4 + $0x10] sm:$0xff] %vm2372, %v2329
      %2376 = vst.msk [vmem:[#allocation4 + $0x18] sm:$0xff] %vm2372, %v2331
      %2377 = vst.msk [vmem:[#allocation4 + $0x20] sm:$0xff] %vm2372, %v2333
      %2378 = vst.msk [vmem:[#allocation4 + $0x28] sm:$0xff] %vm2372, %v2335
      %2379 = vst.msk [vmem:[#allocation4 + $0x30] sm:$0xff] %vm2372, %v2337
      %2380 = vst.msk [vmem:[#allocation4 + $0x38] sm:$0xff] %vm2372, %v2339
      %2381 = vst.msk [vmem:[#allocation4 + $0x40] sm:$0xff] %vm2372, %v2341
      %2382 = vst.msk [vmem:[#allocation4 + $0x48] sm:$0xff] %vm2372, %v2343
      %2383 = vst.msk [vmem:[#allocation4 + $0x50] sm:$0xff] %vm2372, %v2345
      %2384 = vst.msk [vmem:[#allocation4 + $0x58] sm:$0xff] %vm2372, %v2347
      %2385 = vst.msk [vmem:[#allocation4 + $0x60] sm:$0xff] %vm2372, %v2349
      %2386 = vst.msk [vmem:[#allocation4 + $0x68] sm:$0xff] %vm2372, %v2351
      %2387 = vst.msk [vmem:[#allocation4 + $0x70] sm:$0xff] %vm2372, %v2353
      %2388 = vst.msk [vmem:[#allocation4 + $0x78] sm:$0xff] %vm2372, %v2355
      %v2389 = vld [vmem:[#allocation4] sm:$0xff]
      %v2390 = vld [vmem:[#allocation4 + $0x8] sm:$0xff]
      %v2391 = vld [vmem:[#allocation4 + $0x10] sm:$0xff]
      %v2392 = vld [vmem:[#allocation4 + $0x18] sm:$0xff]
      %v2393 = vld [vmem:[#allocation4 + $0x20] sm:$0xff]
      %v2394 = vld [vmem:[#allocation4 + $0x28] sm:$0xff]
      %v2395 = vld [vmem:[#allocation4 + $0x30] sm:$0xff]
      %v2396 = vld [vmem:[#allocation4 + $0x38] sm:$0xff]
      %v2397 = vld [vmem:[#allocation4 + $0x40] sm:$0xff]
      %v2398 = vld [vmem:[#allocation4 + $0x48] sm:$0xff]
      %v2399 = vld [vmem:[#allocation4 + $0x50] sm:$0xff]
      %v2400 = vld [vmem:[#allocation4 + $0x58] sm:$0xff]
      %v2401 = vld [vmem:[#allocation4 + $0x60] sm:$0xff]
      %v2402 = vld [vmem:[#allocation4 + $0x68] sm:$0xff]
      %v2403 = vld [vmem:[#allocation4 + $0x70] sm:$0xff]
      %v2404 = vld [vmem:[#allocation4 + $0x78] sm:$0xff]
      %v2405 = vld [vmem:[%s2] sm:$0xff]
      %v2406 = vld [vmem:[%s2 + $0x8] sm:$0xff]
      %v2407 = vld [vmem:[%s2 + $0x10] sm:$0xff]
      %v2408 = vld [vmem:[%s2 + $0x18] sm:$0xff]
      %v2409 = vld [vmem:[%s2 + $0x20] sm:$0xff]
      %v2410 = vld [vmem:[%s2 + $0x28] sm:$0xff]
      %v2411 = vld [vmem:[%s2 + $0x30] sm:$0xff]
      %v2412 = vld [vmem:[%s2 + $0x38] sm:$0xff]
      %v2413 = vld [vmem:[%s2 + $0x40] sm:$0xff]
      %v2414 = vld [vmem:[%s3] sm:$0x1]
      %v2416 = vlaneseq
      %v2417 = vshrl.u32 %v2416, 7
      %v2418 = vsub.s32 0, %v2417
      %v2419 = vrot.slane %v2414, %v2418
      %vm2421 = vcmask 588800
      %v2423 = vsel %vm2421, %v2389, 0
      %v2426 = vsel %vm2421, %v2390, 0
      %v2429 = vsel %vm2421, %v2391, 0
      %v2432 = vsel %vm2421, %v2392, 0
      %v2435 = vsel %vm2421, %v2393, 0
      %v2438 = vsel %vm2421, %v2394, 0
      %v2441 = vsel %vm2421, %v2395, 0
      %v2444 = vsel %vm2421, %v2396, 0
      %v2447 = vsel %vm2421, %v2397, 0
      %v2450 = vsel %vm2421, %v2398, 0
      %v2453 = vsel %vm2421, %v2399, 0
      %v2456 = vsel %vm2421, %v2400, 0
      %v2459 = vsel %vm2421, %v2401, 0
      %v2462 = vsel %vm2421, %v2402, 0
      %v2465 = vsel %vm2421, %v2403, 0
      %v2468 = vsel %vm2421, %v2404, 0
      %2470 = vmatprep.subr.mxu0 0.0
      %2471 = vmatpush1.msra.mxu0 %v2405
      %2472 = vmatprep.subr.mxu0 0.0
      %2473 = vmatpush1.msra.mxu0 %v2406
      %2474 = vmatprep.subr.mxu0 0.0
      %2475 = vmatpush1.msra.mxu0 %v2407
      %2476 = vmatprep.subr.mxu0 0.0
      %2477 = vmatpush1.msra.mxu0 %v2408
      %2478 = vmatprep.subr.mxu0 0.0
      %2479 = vmatpush1.msra.mxu0 %v2409
      %2480 = vmatprep.subr.mxu0 0.0
      %2481 = vmatpush1.msra.mxu0 %v2410
      %2482 = vmatprep.subr.mxu0 0.0
      %2483 = vmatpush1.msra.mxu0 %v2411
      %2484 = vmatprep.subr.mxu0 0.0
      %2485 = vmatpush1.msra.mxu0 %v2412
      %2486 = vmatprep.subr.mxu0 0.0
      %2487 = vmatpush1.msra.mxu0 %v2413
      %2488 = vmatprep.subr.mxu0 0.0
      %2489 = vmatpush1.msra.mxu0 0.0
      %2490 = vmatprep.subr.mxu0 0.0
      %2491 = vmatpush1.msra.mxu0 0.0
      %2492 = vmatprep.subr.mxu0 0.0
      %2493 = vmatpush1.msra.mxu0 0.0
      %2494 = vmatprep.subr.mxu0 0.0
      %2495 = vmatpush1.msra.mxu0 0.0
      %2496 = vmatprep.subr.mxu0 0.0
      %2497 = vmatpush1.msra.mxu0 0.0
      %2498 = vmatprep.subr.mxu0 0.0
      %2499 = vmatpush1.msra.mxu0 0.0
      %2500 = vmatprep.subr.mxu0 0.0
      %2501 = vmatpush1.msra.mxu0 0.0
      %2502 = vmatprep.subr.mxu0 0.0
      %2503 = vmatpush1.msra.mxu0 0.0
      %2504 = vmatprep.subr.mxu0 0.0
      %2505 = vmatpush1.msra.mxu0 0.0
      %2506 = vmatprep.subr.mxu0 0.0
      %2507 = vmatpush1.msra.mxu0 0.0
      %2508 = vmatprep.subr.mxu0 0.0
      %2509 = vmatpush1.msra.mxu0 0.0
      %2510 = vmatprep.subr.mxu0 0.0
      %2511 = vmatpush1.msra.mxu0 0.0
      %2512 = vmatprep.subr.mxu0 0.0
      %2513 = vmatpush1.msra.mxu0 0.0
      %2514 = vmatprep.subr.mxu0 0.0
      %2515 = vmatpush1.msra.mxu0 0.0
      %2516 = vmatprep.subr.mxu0 0.0
      %2517 = vmatpush1.msra.mxu0 0.0
      %2518 = vmatprep.subr.mxu0 0.0
      %2519 = vmatpush1.msra.mxu0 0.0
      %2520 = vmatprep.subr.mxu0 0.0
      %2521 = vmatpush1.msra.mxu0 0.0
      %2522 = vmatprep.subr.mxu0 0.0
      %2523 = vmatpush1.msra.mxu0 0.0
      %2524 = vmatprep.subr.mxu0 0.0
      %2525 = vmatpush1.msra.mxu0 0.0
      %2526 = vmatprep.subr.mxu0 0.0
      %2527 = vmatpush1.msra.mxu0 0.0
      %2528 = vmatprep.subr.mxu0 0.0
      %2529 = vmatpush1.msra.mxu0 0.0
      %2530 = vmatprep.subr.mxu0 0.0
      %2531 = vmatpush1.msra.mxu0 0.0
      %2532 = vmatprep.subr.mxu0 0.0
      %2533 = vmatpush1.msra.mxu0 0.0
      %2534 = vmatprep.mubr.f32.mxu0 0.0
      %2535 = vmatmul.mubr.f32.gmra.mrb[0].mxu0 %v2423
      %v2536 = vpop.f32.mrb[0].mxu0
      %v2537 = vadd.f32 %v2419, %v2536
      %v2538 = vpop.f32.mrb[0].mxu0
      %2539 = vmatprep.mubr.f32.mxu0 0.0
      %2540 = vmatmul.mubr.f32.gmra.mrb[0].mxu0 %v2426
      %v2541 = vpop.f32.mrb[0].mxu0
      %v2542 = vadd.f32 %v2419, %v2541
      %v2543 = vpop.f32.mrb[0].mxu0
      %2544 = vmatprep.mubr.f32.mxu0 0.0
      %2545 = vmatmul.mubr.f32.gmra.mrb[0].mxu0 %v2429
      %v2546 = vpop.f32.mrb[0].mxu0
      %v2547 = vadd.f32 %v2419, %v2546
      %v2548 = vpop.f32.mrb[0].mxu0
      %2549 = vmatprep.mubr.f32.mxu0 0.0
      %2550 = vmatmul.mubr.f32.gmra.mrb[0].mxu0 %v2432
      %v2551 = vpop.f32.mrb[0].mxu0
      %v2552 = vadd.f32 %v2419, %v2551
      %v2553 = vpop.f32.mrb[0].mxu0
      %2554 = vmatprep.mubr.f32.mxu0 0.0
      %2555 = vmatmul.mubr.f32.gmra.mrb[0].mxu0 %v2435
      %v2556 = vpop.f32.mrb[0].mxu0
      %v2557 = vadd.f32 %v2419, %v2556
      %v2558 = vpop.f32.mrb[0].mxu0
      %2559 = vmatprep.mubr.f32.mxu0 0.0
      %2560 = vmatmul.mubr.f32.gmra.mrb[0].mxu0 %v2438
      %v2561 = vpop.f32.mrb[0].mxu0
      %v2562 = vadd.f32 %v2419, %v2561
      %v2563 = vpop.f32.mrb[0].mxu0
      %2564 = vmatprep.mubr.f32.mxu0 0.0
      %2565 = vmatmul.mubr.f32.gmra.mrb[0].mxu0 %v2441
      %v2566 = vpop.f32.mrb[0].mxu0
      %v2567 = vadd.f32 %v2419, %v2566
      %v2568 = vpop.f32.mrb[0].mxu0
      %2569 = vmatprep.mubr.f32.mxu0 0.0
      %2570 = vmatmul.mubr.f32.gmra.mrb[0].mxu0 %v2444
      %v2571 = vpop.f32.mrb[0].mxu0
      %v2572 = vadd.f32 %v2419, %v2571
      %v2573 = vpop.f32.mrb[0].mxu0
      %2574 = vmatprep.mubr.f32.mxu0 0.0
      %2575 = vmatmul.mubr.f32.gmra.mrb[0].mxu0 %v2447
      %v2576 = vpop.f32.mrb[0].mxu0
      %v2577 = vadd.f32 %v2419, %v2576
      %v2578 = vpop.f32.mrb[0].mxu0
      %2579 = vmatprep.mubr.f32.mxu0 0.0
      %2580 = vmatmul.mubr.f32.gmra.mrb[0].mxu0 %v2450
      %v2581 = vpop.f32.mrb[0].mxu0
      %v2582 = vadd.f32 %v2419, %v2581
      %v2583 = vpop.f32.mrb[0].mxu0
      %2584 = vmatprep.mubr.f32.mxu0 0.0
      %2585 = vmatmul.mubr.f32.gmra.mrb[0].mxu0 %v2453
      %v2586 = vpop.f32.mrb[0].mxu0
      %v2587 = vadd.f32 %v2419, %v2586
      %v2588 = vpop.f32.mrb[0].mxu0
      %2589 = vmatprep.mubr.f32.mxu0 0.0
      %2590 = vmatmul.mubr.f32.gmra.mrb[0].mxu0 %v2456
      %v2591 = vpop.f32.mrb[0].mxu0
      %v2592 = vadd.f32 %v2419, %v2591
      %v2593 = vpop.f32.mrb[0].mxu0
      %2594 = vmatprep.mubr.f32.mxu0 0.0
      %2595 = vmatmul.mubr.f32.gmra.mrb[0].mxu0 %v2459
      %v2596 = vpop.f32.mrb[0].mxu0
      %v2597 = vadd.f32 %v2419, %v2596
      %v2598 = vpop.f32.mrb[0].mxu0
      %2599 = vmatprep.mubr.f32.mxu0 0.0
      %2600 = vmatmul.mubr.f32.gmra.mrb[0].mxu0 %v2462
      %v2601 = vpop.f32.mrb[0].mxu0
      %v2602 = vadd.f32 %v2419, %v2601
      %v2603 = vpop.f32.mrb[0].mxu0
      %2604 = vmatprep.mubr.f32.mxu0 0.0
      %2605 = vmatmul.mubr.f32.gmra.mrb[0].mxu0 %v2465
      %v2606 = vpop.f32.mrb[0].mxu0
      %v2607 = vadd.f32 %v2419, %v2606
      %v2608 = vpop.f32.mrb[0].mxu0
      %2609 = vmatprep.mubr.f32.mxu0 0.0
      %2610 = vmatmul.mubr.f32.gmra.mrb[0].mxu0 %v2468
      %v2611 = vpop.f32.mrb[0].mxu0
      %v2612 = vadd.f32 %v2419, %v2611
      %v2613 = vpop.f32.mrb[0].mxu0
      %2614 = vdwg.mxu0
      %2615 = vrot.lane.b32.xlu0 %v2389, 96
      %v2616 = vpop.permute.xlu0 %2615
      %2617 = vrot.lane.b32.xlu0 %v2390, 96
      %v2618 = vpop.permute.xlu0 %2617
      %2619 = vrot.lane.b32.xlu0 %v2391, 96
      %v2620 = vpop.permute.xlu0 %2619
      %2621 = vrot.lane.b32.xlu0 %v2392, 96
      %v2622 = vpop.permute.xlu0 %2621
      %2623 = vrot.lane.b32.xlu0 %v2393, 96
      %v2624 = vpop.permute.xlu0 %2623
      %2625 = vrot.lane.b32.xlu0 %v2394, 96
      %v2626 = vpop.permute.xlu0 %2625
      %2627 = vrot.lane.b32.xlu0 %v2395, 96
      %v2628 = vpop.permute.xlu0 %2627
      %2629 = vrot.lane.b32.xlu0 %v2396, 96
      %v2630 = vpop.permute.xlu0 %2629
      %2631 = vrot.lane.b32.xlu0 %v2397, 96
      %v2632 = vpop.permute.xlu0 %2631
      %2633 = vrot.lane.b32.xlu0 %v2398, 96
      %v2634 = vpop.permute.xlu0 %2633
      %2635 = vrot.lane.b32.xlu0 %v2399, 96
      %v2636 = vpop.permute.xlu0 %2635
      %2637 = vrot.lane.b32.xlu0 %v2400, 96
      %v2638 = vpop.permute.xlu0 %2637
      %2639 = vrot.lane.b32.xlu0 %v2401, 96
      %v2640 = vpop.permute.xlu0 %2639
      %2641 = vrot.lane.b32.xlu0 %v2402, 96
      %v2642 = vpop.permute.xlu0 %2641
      %2643 = vrot.lane.b32.xlu0 %v2403, 96
      %v2644 = vpop.permute.xlu0 %2643
      %2645 = vrot.lane.b32.xlu0 %v2404, 96
      %v2646 = vpop.permute.xlu0 %2645
      %v2663 = vadd.f32 %v2537, %v2616
      %v2664 = vadd.f32 %v2542, %v2618
      %v2665 = vadd.f32 %v2547, %v2620
      %v2666 = vadd.f32 %v2552, %v2622
      %v2667 = vadd.f32 %v2557, %v2624
      %v2668 = vadd.f32 %v2562, %v2626
      %v2669 = vadd.f32 %v2567, %v2628
      %v2670 = vadd.f32 %v2572, %v2630
      %v2671 = vadd.f32 %v2577, %v2632
      %v2672 = vadd.f32 %v2582, %v2634
      %v2673 = vadd.f32 %v2587, %v2636
      %v2674 = vadd.f32 %v2592, %v2638
      %v2675 = vadd.f32 %v2597, %v2640
      %v2676 = vadd.f32 %v2602, %v2642
      %v2677 = vadd.f32 %v2607, %v2644
      %v2678 = vadd.f32 %v2612, %v2646
      %vm2679 = vcmask 64512
      %2680 = vst.msk [vmem:[%s239] sm:$0xff] %vm2679, %v2663
      %2681 = vst.msk [vmem:[%s239 + $0x8] sm:$0xff] %vm2679, %v2664
      %2682 = vst.msk [vmem:[%s239 + $0x10] sm:$0xff] %vm2679, %v2665
      %2683 = vst.msk [vmem:[%s239 + $0x18] sm:$0xff] %vm2679, %v2666
      %2684 = vst.msk [vmem:[%s239 + $0x20] sm:$0xff] %vm2679, %v2667
      %2685 = vst.msk [vmem:[%s239 + $0x28] sm:$0xff] %vm2679, %v2668
      %2686 = vst.msk [vmem:[%s239 + $0x30] sm:$0xff] %vm2679, %v2669
      %2687 = vst.msk [vmem:[%s239 + $0x38] sm:$0xff] %vm2679, %v2670
      %2688 = vst.msk [vmem:[%s239 + $0x40] sm:$0xff] %vm2679, %v2671
      %2689 = vst.msk [vmem:[%s239 + $0x48] sm:$0xff] %vm2679, %v2672
      %2690 = vst.msk [vmem:[%s239 + $0x50] sm:$0xff] %vm2679, %v2673
      %2691 = vst.msk [vmem:[%s239 + $0x58] sm:$0xff] %vm2679, %v2674
      %2692 = vst.msk [vmem:[%s239 + $0x60] sm:$0xff] %vm2679, %v2675
      %2693 = vst.msk [vmem:[%s239 + $0x68] sm:$0xff] %vm2679, %v2676
      %2694 = vst.msk [vmem:[%s239 + $0x70] sm:$0xff] %vm2679, %v2677
      %2695 = vst.msk [vmem:[%s239 + $0x78] sm:$0xff] %vm2679, %v2678
      %s2696 = smul.u32 16, %s20
      %p2697 = scmp.lt.s32.totalorder %s19, 1
      %s2698 = scalar_select %p2697, %s19, 1
      %p2699 = scmp.lt.s32.totalorder %s2696, 31
      %s2700 = scalar_select %p2699, %s2696, 31
      %s2701 = smul.addr %s2698, 32
      %s2702 = sadd.s32 %s2700, %s2701
      %s2703 = smul.addr %s2702, 8
      %s2704 = scalar_lea.vmem %s4, %s2703
      // Predicated region
      $region41: #{tpu_custom_call.1} parent=35 // pred_check
        %p2705 = pneg %p141
      $region42: #{tpu_custom_call.1} parent=35 // pred_check_branch
        %2707 = sbr.rel (%p2705) target = $region44
      $region43: #{tpu_custom_call.1} parent=35 // pred_region
        %s2708 = smul.u32 16, %s20
      $region44: #{tpu_custom_call.1} parent=35 // pred_fallthru
        _
    $region36: #{tpu_custom_call.1} parent=5 // pred_fallthru
      _
    %p2709 = scmp.le.s32.totalorder 2, %s10
    // Predicated region
    $region45: #{tpu_custom_call.1} parent=5 // pred_check
      %p2710 = pneg %p2709
    $region46: #{tpu_custom_call.1} parent=5 // pred_check_branch
      %2712 = sbr.rel (%p2710) target = $region48
    $region47: #{tpu_custom_call.1} parent=5 // pred_region
      %s2713 = ssub.s32 %s10, 2
      // Predicated region
      $region49: #{tpu_custom_call.1} parent=47 // pred_check
        %p2714 = pneg %p147
      $region50: #{tpu_custom_call.1} parent=47 // pred_check_branch
        %2716 = sbr.rel (%p2714) target = $region52
      $region51: #{tpu_custom_call.1} parent=47 // pred_region
        %s2717 = smul.u32 16, %s22
        %p2718 = scmp.lt.s32.totalorder %s21, 1
        %s2719 = scalar_select %p2718, %s21, 1
        %p2720 = scmp.lt.s32.totalorder %s2717, 31
        %s2721 = scalar_select %p2720, %s2717, 31
        %s2722 = smul.addr %s2719, 32
        %s2723 = sadd.s32 %s2721, %s2722
        %s2724 = smul.addr %s2723, 8
        %s2725 = scalar_lea.vmem %s4, %s2724
      $region52: #{tpu_custom_call.1} parent=47 // pred_fallthru
        _
    $region48: #{tpu_custom_call.1} parent=5 // pred_fallthru
      _
  $region6: #{tpu_custom_call.1} parent=0 // loop_footer
    %s14 = sadd.s32 1, %s10
  $region7: #{tpu_custom_call.1} parent=0 // loop_footer_branch
    %9 = sbr.rel target = $region3
  $region8: #{tpu_custom_call.1} parent=0 // loop_exit
    _

</llo_original>
